<compile_context>
chip_gen: v7x
topology: tpu7x:2x2x1
jax: 0.10.0
libtpu: 0.0.40
codegen_flags: <defaults>
</compile_context>

<pallas_src>
import functools

import jax
import jax.numpy as jnp
from jax.experimental import pallas as pl
from jax.experimental.pallas import tpu as pltpu


def _round_up(x, m):
    return ((x + m - 1) // m) * m


def _conv_bn_silu_kernel(x_ref, w_ref, shift_ref, o_ref, *, kh, wp, tm):
    """One (batch sample, Cout tile, M tile) block.

    x_ref     : (1, SLAB, KW*Cin)  bf16 width-im2col slab of the padded image
    w_ref     : (KH, KW*Cin, TCO)  bf16 conv weights with BN scale folded in
    shift_ref : (1, TCO)           f32 folded BN shift
    o_ref     : (1, TM, TCO)       output tile
    """
    base = pl.multiple_of(pl.program_id(2) * tm, 8)
    # Direct convolution over the stride-1 virtual output grid: tap-row i of
    # the receptive field is the slab window starting i*Wp rows further down.
    acc = jnp.dot(x_ref[0, pl.ds(base, tm), :], w_ref[0],
                  preferred_element_type=jnp.float32)
    for i in range(1, kh):
        off = pl.multiple_of(base + i * wp, 8)
        acc += jnp.dot(x_ref[0, pl.ds(off, tm), :], w_ref[i],
                       preferred_element_type=jnp.float32)
    y = acc + shift_ref[...]                                  # folded BN (f32)
    o_ref[0] = (y * jax.nn.sigmoid(y)).astype(o_ref.dtype)    # SiLU (EUP)


@functools.partial(jax.jit, static_argnames=("stride", "padding", "eps"))
def conv_bn_silu(x_nchw, weight_oihw, gamma, beta, running_mean, running_var,
                 *, stride, padding, eps=1e-5):
    n, cin, h, w = x_nchw.shape
    cout, cin_w, kh, kw = weight_oihw.shape
    assert cin == cin_w  # TODO(synk): grouped conv (groups > 1) not implemented

    hp = h + 2 * padding
    wp_orig = w + 2 * padding
    oh = (hp - kh) // stride + 1
    ow = (wp_orig - kw) // stride + 1
    oh1 = hp - kh + 1            # stride-1 output rows (virtual grid rows)
    ow1 = wp_orig - kw + 1       # stride-1 valid output columns

    # Sublane-aligned row pitch: pad the image width to a multiple of 8 so
    # every tap-slice start (mt*TM + i*Wp) is a multiple of 8.
    wp = _round_up(wp_orig, 8)

    # Virtual output grid: oh1 rows x wp cols per image (wrap / width-pad
    # columns are dropped in the wrapper).
    # TODO(synk): stride > 1 overcomputes ~stride^2; a strided kernel variant
    # would avoid that (this test uses stride=1).
    m_v = oh1 * wp
    n_mt = pl.cdiv(m_v, 512)                  # TM <= 512 (fits v7x VMEM too)
    tm = max(8, _round_up(pl.cdiv(m_v, n_mt), 8))
    m_v_pad = _round_up(m_v, tm)

    # ---- glue (layout only): NCHW -> NHWC, spatial pad, width-im2col, bf16 --
    x_nhwc = jnp.transpose(x_nchw, (0, 2, 3, 1))
    x_p = jnp.pad(x_nhwc, ((0, 0), (padding, padding),
                           (padding, padding + (wp - wp_orig)), (0, 0)))
    x_flat = x_p.reshape(n, hp * wp, cin)

    slab_len = m_v_pad + (kh - 1) * wp
    flat_len = slab_len + kw - 1
    if flat_len > hp * wp:
        x_flat = jnp.pad(x_flat, ((0, 0), (0, flat_len - hp * wp), (0, 0)))
    # Width-im2col: the KW taps of a position are adjacent rows of x_flat.
    slab = jnp.concatenate([x_flat[:, j:j + slab_len, :] for j in range(kw)],
                           axis=-1).astype(jnp.bfloat16)   # (n, SLAB, KW*Cin)
    kwcin = kw * cin

    # ---- eval-mode BatchNorm fold: y = conv(x, W) * scale + shift ----------
    scale = gamma / jnp.sqrt(running_var + eps)             # (Cout,)
    shift = beta - running_mean * scale                     # (Cout,)

    # (Cout, Cin, KH, KW) -> (KH, KW, Cin, Cout) -> (KH, KW*Cin, Cout); the
    # (j, cin) order matches the slab's last-dim order.  BN scale folded in.
    w_rows = jnp.transpose(weight_oihw, (2, 3, 1, 0)).reshape(kh, kwcin, cout)
    w_rows = w_rows * scale[None, None, :]

    # Cout tiling: don't pad small Cout up to 128 (the output write is the
    # dominant HBM stream); for large Cout use lane-dense 256-wide tiles.
    if cout <= 256:
        cout_pad = _round_up(cout, 8)
        tco = cout_pad
    else:
        cout_pad = _round_up(cout, 256)
        tco = 256
    if cout_pad != cout:
        w_rows = jnp.pad(w_rows, ((0, 0), (0, 0), (0, cout_pad - cout)))
        shift = jnp.pad(shift, (0, cout_pad - cout))
    w_rows = w_rows.astype(jnp.bfloat16)
    shift2d = shift.reshape(1, cout_pad).astype(jnp.float32)

    # M tiles innermost so the weight / shift tile stays resident per (b, co).
    grid = (n, cout_pad // tco, m_v_pad // tm)
    kernel = functools.partial(_conv_bn_silu_kernel, kh=kh, wp=wp, tm=tm)

    out_dtype = x_nchw.dtype
    flops = 2 * n * m_v_pad * kh * kwcin * cout_pad
    bytes_accessed = (slab.size * 2 + w_rows.size * 2 + shift2d.size * 4
                      + n * m_v_pad * cout_pad * jnp.dtype(out_dtype).itemsize)
    cost = pl.CostEstimate(flops=flops,
                           transcendentals=n * m_v_pad * cout_pad,
                           bytes_accessed=bytes_accessed)

    # Resident VMEM: double-buffered slab (per sample) + weight tile + shift +
    # out tile + f32 accumulator; state it explicitly (v5e default scoped limit
    # is only 16 MiB), capped at 64 MiB (v7x physical).
    slab_sample_bytes = slab_len * kwcin * 2
    vmem_need = (2 * slab_sample_bytes + 2 * kh * kwcin * tco * 2
                 + 2 * tm * tco * 4 + 2 * tm * tco * 4 + (4 << 20))
    vmem_limit = int(min(64 << 20, max(16 << 20, vmem_need)))
    # TODO(synk): for very large images (slab approaching v7x's 64 MiB VMEM)
    # move the slab to memory_space=pl.ANY and manually DMA per-M-tile halo
    # windows with make_async_copy double-buffering.

    out3d = pl.pallas_call(
        kernel,
        out_shape=jax.ShapeDtypeStruct((n, m_v_pad, cout_pad), out_dtype),
        grid_spec=pltpu.PrefetchScalarGridSpec(
            num_scalar_prefetch=0,
            grid=grid,
            in_specs=[
                # Whole width-im2col slab resident per batch sample.
                pl.BlockSpec((1, slab_len, kwcin), lambda b, co, mt: (b, 0, 0)),
                # Weight / shift block index constant over the inner M loop.
                pl.BlockSpec((kh, kwcin, tco), lambda b, co, mt: (0, 0, co)),
                pl.BlockSpec((1, tco), lambda b, co, mt: (0, co)),
            ],
            out_specs=pl.BlockSpec((1, tm, tco), lambda b, co, mt: (b, mt, co)),
        ),
        compiler_params=pltpu.CompilerParams(
            dimension_semantics=("parallel", "parallel", "parallel"),
            vmem_limit_bytes=vmem_limit),
        cost_estimate=cost,
    )(slab, w_rows, shift2d)

    # Valid region: first m_v virtual rows, first Cout channels; drop the
    # wrap / width-pad columns, apply stride subsampling, back to NCHW.
    # TODO(synk): emitting NHWC directly (skipping the final transpose) would
    # save a full HBM pass if the consumer accepted NHWC.
    out_full = out3d[:, :m_v, :cout].reshape(n, oh1, wp, cout)
    out_nhwc = out_full[:, ::stride, 0:ow1:stride, :]
    return jnp.transpose(out_nhwc, (0, 3, 1, 2))


def _reference(x_nchw, weight_oihw, gamma, beta, mean, var, stride, padding,
               eps=1e-5):
    conv = jax.lax.conv_general_dilated(
        x_nchw, weight_oihw,
        window_strides=(stride, stride),
        padding=[(padding, padding), (padding, padding)],
        dimension_numbers=("NCHW", "OIHW", "NCHW"))
    scale = (gamma / jnp.sqrt(var + eps)).reshape(1, -1, 1, 1)
    shift = (beta - mean * gamma / jnp.sqrt(var + eps)).reshape(1, -1, 1, 1)
    y = conv * scale + shift
    return y * jax.nn.sigmoid(y)


if __name__ == "__main__":
    key = jax.random.PRNGKey(0)
    k_x, k_w, k_g, k_b, k_m, k_v = jax.random.split(key, 6)

    # ConvBNSiLU(in_channels=4, out_channels=8, kernel_size=3, stride=1,
    #            padding=1, groups=1, activation=nn.SiLU())
    N, Cin, H, W = 2, 4, 16, 16
    Cout, KH, KW = 8, 3, 3
    stride, padding = 1, 1

    x = jax.random.normal(k_x, (N, Cin, H, W), dtype=jnp.float32)
    weight = jax.random.normal(k_w, (Cout, Cin, KH, KW), dtype=jnp.float32) * 0.1
    gamma = jax.random.normal(k_g, (Cout,), dtype=jnp.float32) * 0.1 + 1.0
    beta = jax.random.normal(k_b, (Cout,), dtype=jnp.float32) * 0.1
    running_mean = jax.random.normal(k_m, (Cout,), dtype=jnp.float32) * 0.1
    running_var = jax.random.uniform(k_v, (Cout,), dtype=jnp.float32,
                                     minval=0.5, maxval=1.5)

    out = conv_bn_silu(x, weight, gamma, beta, running_mean, running_var,
                       stride=stride, padding=padding)
    out = jax.block_until_ready(out)

    ref = _reference(x, weight, gamma, beta, running_mean, running_var,
                     stride, padding)
    assert out.shape == (N, Cout, H, W)
    # bf16 MXU inputs (f32 accumulation / epilogue) vs. the f32 XLA reference.
    assert jnp.allclose(out, ref, atol=5e-2, rtol=5e-2), float(
        jnp.max(jnp.abs(out - ref)))

    print("KERNEL_OK")
</pallas_src>

<mosaic_0001>
module attributes {stable_mosaic.version = 11 : i64} {
  func.func @_conv_bn_silu_kernel(%arg0: i32, %arg1: i32, %arg2: i32, %arg3: memref<1x432x12xbf16, #tpu.memory_space<vmem>>, %arg4: memref<3x12x8xbf16, #tpu.memory_space<vmem>>, %arg5: memref<1x8xf32, #tpu.memory_space<vmem>>, %arg6: memref<1x384x8xf32, #tpu.memory_space<vmem>>) attributes {dimension_semantics = [#tpu.dimension_semantics<parallel>, #tpu.dimension_semantics<parallel>, #tpu.dimension_semantics<parallel>], iteration_bounds = array<i64: 2, 1, 1>, scalar_prefetch = 0 : i64, scratch_operands = 0 : i64, tpu.core_type = #tpu.core_type<tc>, window_params = [{transform_indices = @transform_0, window_bounds = array<i64: 1, 432, 12>}, {transform_indices = @transform_1, window_bounds = array<i64: 3, 12, 8>}, {transform_indices = @transform_2, window_bounds = array<i64: 1, 8>}, {transform_indices = @transform_3, window_bounds = array<i64: 1, 384, 8>}]} {
    %c384_i32 = arith.constant 384 : i32
    %0 = arith.muli %arg2, %c384_i32 : i32
    %1 = tpu.assume_multiple %0, 8 : i32
    %c0 = arith.constant 0 : index
    %2 = arith.index_cast %1 : i32 to index
    %c0_0 = arith.constant 0 : index
    %3 = vector.load %arg3[%c0, %2, %c0_0] : memref<1x432x12xbf16, #tpu.memory_space<vmem>>, vector<1x384x12xbf16>
    %4 = vector.shape_cast %3 : vector<1x384x12xbf16> to vector<384x12xbf16>
    %c0_1 = arith.constant 0 : index
    %c0_2 = arith.constant 0 : index
    %c0_3 = arith.constant 0 : index
    %5 = vector.load %arg4[%c0_1, %c0_2, %c0_3] : memref<3x12x8xbf16, #tpu.memory_space<vmem>>, vector<1x12x8xbf16>
    %6 = vector.shape_cast %5 : vector<1x12x8xbf16> to vector<12x8xbf16>
    %cst = arith.constant dense<0.000000e+00> : vector<384x8xf32>
    %7 = tpu.matmul %4, %6, %cst {dimension_numbers = #tpu.dot_dimension_numbers<[1], [0], [0], [1], [0, 0, 1, 1], [], []>} : vector<384x12xbf16>, vector<12x8xbf16>, vector<384x8xf32> -> vector<384x8xf32>
    %c24_i32 = arith.constant 24 : i32
    %8 = arith.addi %1, %c24_i32 : i32
    %9 = tpu.assume_multiple %8, 8 : i32
    %c0_4 = arith.constant 0 : index
    %10 = arith.index_cast %9 : i32 to index
    %c0_5 = arith.constant 0 : index
    %11 = vector.load %arg3[%c0_4, %10, %c0_5] : memref<1x432x12xbf16, #tpu.memory_space<vmem>>, vector<1x384x12xbf16>
    %12 = vector.shape_cast %11 : vector<1x384x12xbf16> to vector<384x12xbf16>
    %c1 = arith.constant 1 : index
    %c0_6 = arith.constant 0 : index
    %c0_7 = arith.constant 0 : index
    %13 = vector.load %arg4[%c1, %c0_6, %c0_7] : memref<3x12x8xbf16, #tpu.memory_space<vmem>>, vector<1x12x8xbf16>
    %14 = vector.shape_cast %13 : vector<1x12x8xbf16> to vector<12x8xbf16>
    %cst_8 = arith.constant dense<0.000000e+00> : vector<384x8xf32>
    %15 = tpu.matmul %12, %14, %cst_8 {dimension_numbers = #tpu.dot_dimension_numbers<[1], [0], [0], [1], [0, 0, 1, 1], [], []>} : vector<384x12xbf16>, vector<12x8xbf16>, vector<384x8xf32> -> vector<384x8xf32>
    %16 = arith.addf %7, %15 : vector<384x8xf32>
    %c48_i32 = arith.constant 48 : i32
    %17 = arith.addi %1, %c48_i32 : i32
    %18 = tpu.assume_multiple %17, 8 : i32
    %c0_9 = arith.constant 0 : index
    %19 = arith.index_cast %18 : i32 to index
    %c0_10 = arith.constant 0 : index
    %20 = vector.load %arg3[%c0_9, %19, %c0_10] : memref<1x432x12xbf16, #tpu.memory_space<vmem>>, vector<1x384x12xbf16>
    %21 = vector.shape_cast %20 : vector<1x384x12xbf16> to vector<384x12xbf16>
    %c2 = arith.constant 2 : index
    %c0_11 = arith.constant 0 : index
    %c0_12 = arith.constant 0 : index
    %22 = vector.load %arg4[%c2, %c0_11, %c0_12] : memref<3x12x8xbf16, #tpu.memory_space<vmem>>, vector<1x12x8xbf16>
    %23 = vector.shape_cast %22 : vector<1x12x8xbf16> to vector<12x8xbf16>
    %cst_13 = arith.constant dense<0.000000e+00> : vector<384x8xf32>
    %24 = tpu.matmul %21, %23, %cst_13 {dimension_numbers = #tpu.dot_dimension_numbers<[1], [0], [0], [1], [0, 0, 1, 1], [], []>} : vector<384x12xbf16>, vector<12x8xbf16>, vector<384x8xf32> -> vector<384x8xf32>
    %25 = arith.addf %16, %24 : vector<384x8xf32>
    %c0_14 = arith.constant 0 : index
    %c0_15 = arith.constant 0 : index
    %26 = vector.load %arg5[%c0_14, %c0_15] : memref<1x8xf32, #tpu.memory_space<vmem>>, vector<1x8xf32>
    %27 = vector.broadcast %26 : vector<1x8xf32> to vector<384x8xf32>
    %28 = arith.addf %25, %27 : vector<384x8xf32>
    %29 = arith.negf %28 : vector<384x8xf32>
    %30 = math.exp %29 : vector<384x8xf32>
    %cst_16 = arith.constant 1.000000e+00 : f32
    %31 = vector.broadcast %cst_16 : f32 to vector<384x8xf32>
    %32 = arith.addf %31, %30 : vector<384x8xf32>
    %33 = arith.divf %31, %32 : vector<384x8xf32>
    %34 = arith.mulf %28, %33 : vector<384x8xf32>
    %c0_17 = arith.constant 0 : index
    %c0_18 = arith.constant 0 : index
    %c0_19 = arith.constant 0 : index
    %35 = vector.load %arg6[%c0_17, %c0_18, %c0_19] : memref<1x384x8xf32, #tpu.memory_space<vmem>>, vector<1x384x8xf32>
    %36 = vector.shape_cast %35 : vector<1x384x8xf32> to vector<384x8xf32>
    %37 = vector.shape_cast %34 : vector<384x8xf32> to vector<1x384x8xf32>
    tpu.vector_store %arg6[%c0_17, %c0_18, %c0_19], %37 {strides = array<i32>} : memref<1x384x8xf32, #tpu.memory_space<vmem>>, vector<1x384x8xf32>,
    return
  }
  func.func @transform_0(%arg0: i32, %arg1: i32, %arg2: i32) -> (i32, i32, i32) {
    %c0_i32 = arith.constant 0 : i32
    %c0_i32_0 = arith.constant 0 : i32
    %c0_i32_1 = arith.constant 0 : i32
    return %arg0, %c0_i32, %c0_i32_0 : i32, i32, i32
  }
  func.func @transform_1(%arg0: i32, %arg1: i32, %arg2: i32) -> (i32, i32, i32) {
    %c0_i32 = arith.constant 0 : i32
    %c0_i32_0 = arith.constant 0 : i32
    %c0_i32_1 = arith.constant 0 : i32
    return %c0_i32, %c0_i32_0, %arg1 : i32, i32, i32
  }
  func.func @transform_2(%arg0: i32, %arg1: i32, %arg2: i32) -> (i32, i32) {
    %c0_i32 = arith.constant 0 : i32
    %c0_i32_0 = arith.constant 0 : i32
    return %c0_i32, %arg1 : i32, i32
  }
  func.func @transform_3(%arg0: i32, %arg1: i32, %arg2: i32) -> (i32, i32, i32) {
    %c0_i32 = arith.constant 0 : i32
    return %arg0, %arg2, %arg1 : i32, i32, i32
  }
}

</mosaic_0001>

<llo_original>
// kernel: conv_bn_silu.1
$region0: #{conv_bn_silu.1}
  #allocation0 [shape = 'u32[]', space=smem, size = 0x4, offset = 0x4, fixed_abs, tag = 'smem constant byte address 0x4 - core index']
  #allocation1 [shape = 'u32[144,128]{1,0:T(1,128)}', space=vmem, size = 0x12000, scoped, tag = 'internal scratch']
  %s0 = inlined_call_operand.vmem [shape: bf16[2,432,12], index: 0, kind: input, shape index: {}]
  %s1 = inlined_call_operand.vmem [shape: bf16[3,12,8], index: 1, kind: input, shape index: {}]
  %s2 = inlined_call_operand.vmem [shape: f32[1,8], index: 2, kind: input, shape index: {}]
  %s3 = inlined_call_operand.vmem [shape: f32[2,384,8], index: 3, kind: output, shape index: {}]
  %s4 = sld [smem:[#allocation0]]
  $region45: #{conv_bn_silu.1} parent=0
    _
  %s6 = ssub.s32 1, %s4
  %s7 = scalar_select 0, %s6, %s4
  loop: start=0, step=1, limit=4
  $region2: #{conv_bn_silu.1} parent=0 // loop_pre_header
    _
  $region3: #{conv_bn_silu.1} parent=0 // loop_header
    %s9 = sphi 0, %s13
    %p10 = scmp.ge.s32.totalorder %s9, 4
    %s16 = sphi 0, %s35
    %s17 = sphi 0, %s31
    %s18 = sphi 0, %s27
    %s19 = sphi 0, %s16
    %s20 = sphi 0, %s17
    %s21 = sphi 0, %s18
    %s22 = sphi 0, %s19
    %s23 = sphi 0, %s20
    %s24 = sphi 0, %s21
    %s38 = sphi 0, %s40
    %s41 = sphi 0, %s38
    %s42 = sphi 0, %s41
    %s58 = sphi 0, %s42
    %s64 = sphi 0, %s66
    %s67 = sphi 0, %s64
    %s68 = sphi 0, %s67
    %s84 = sphi 0, %s68
    %s90 = sphi 0, %s92
    %s93 = sphi 0, %s90
    %s94 = sphi 0, %s93
    %s110 = sphi 0, %s94
    %s120 = sphi 0, %s122
    %s123 = sphi 0, %s120
    %s124 = sphi 0, %s123
    %s140 = sphi 0, %s124
  $region4: #{conv_bn_silu.1} parent=0 // loop_header_branch
    %12 = sbr.rel (%p10) target = $region8
  $region5: #{conv_bn_silu.1} parent=0 // loop_body
    %s14 = ssub.s32 %s9, 1
    %s15 = ssub.s32 %s9, 2
    %s25 = sadd.s32 1, %s18
    %p26 = scmp.ge.s32.totalorder %s25, 1
    %s27 = scalar_select %p26, 0, %s25
    %s28 = sadd.s32 1, %s17
    %s29 = scalar_select %p26, %s28, %s17
    %p30 = scmp.ge.s32.totalorder %s29, 1
    %s31 = scalar_select %p30, 0, %s29
    %s32 = sadd.s32 1, %s16
    %s33 = scalar_select %p30, %s32, %s16
    %p34 = scmp.ge.s32.totalorder %s33, 2
    %s35 = scalar_select %p34, 0, %s33
    %s36 = ssub.s32 %s16, %s35
    %p37 = scmp.eq.s32.totalorder %s36, 0
    %s39 = sadd.s32 %s38, 1
    %s40 = scalar_select %p37, %s38, %s39
    %p43 = pneg %p37
    %p44 = scmp.eq.s32.totalorder %s9, 1
    %p45 = por %p43, %p44
    %p46 = scmp.ne.s32.totalorder %s38, %s41
    %p47 = scmp.eq.s32.totalorder %s9, 0
    %p48 = por %p46, %p47
    %p49 = scmp.ne.s32.totalorder %s38, %s41
    %p50 = scmp.eq.s32.totalorder %s14, 1
    %p51 = por %p49, %p50
    %p52 = scmp.ne.s32.totalorder %s41, %s42
    %p53 = scmp.eq.s32.totalorder %s14, 0
    %p54 = por %p52, %p53
    %p55 = scmp.ne.s32.totalorder %s41, %s42
    %p56 = scmp.eq.s32.totalorder %s15, 1
    %p57 = por %p55, %p56
    %p59 = scmp.ne.s32.totalorder %s42, %s58
    %p60 = scmp.eq.s32.totalorder %s15, 0
    %p61 = por %p59, %p60
    %s62 = ssub.s32 %s17, %s31
    %p63 = scmp.eq.s32.totalorder %s62, 0
    %s65 = sadd.s32 %s64, 1
    %s66 = scalar_select %p63, %s64, %s65
    %p69 = pneg %p63
    %p70 = scmp.eq.s32.totalorder %s9, 1
    %p71 = por %p69, %p70
    %p72 = scmp.ne.s32.totalorder %s64, %s67
    %p73 = scmp.eq.s32.totalorder %s9, 0
    %p74 = por %p72, %p73
    %p75 = scmp.ne.s32.totalorder %s64, %s67
    %p76 = scmp.eq.s32.totalorder %s14, 1
    %p77 = por %p75, %p76
    %p78 = scmp.ne.s32.totalorder %s67, %s68
    %p79 = scmp.eq.s32.totalorder %s14, 0
    %p80 = por %p78, %p79
    %p81 = scmp.ne.s32.totalorder %s67, %s68
    %p82 = scmp.eq.s32.totalorder %s15, 1
    %p83 = por %p81, %p82
    %p85 = scmp.ne.s32.totalorder %s68, %s84
    %p86 = scmp.eq.s32.totalorder %s15, 0
    %p87 = por %p85, %p86
    %s88 = ssub.s32 %s17, %s31
    %p89 = scmp.eq.s32.totalorder %s88, 0
    %s91 = sadd.s32 %s90, 1
    %s92 = scalar_select %p89, %s90, %s91
    %p95 = pneg %p89
    %p96 = scmp.eq.s32.totalorder %s9, 1
    %p97 = por %p95, %p96
    %p98 = scmp.ne.s32.totalorder %s90, %s93
    %p99 = scmp.eq.s32.totalorder %s9, 0
    %p100 = por %p98, %p99
    %p101 = scmp.ne.s32.totalorder %s90, %s93
    %p102 = scmp.eq.s32.totalorder %s14, 1
    %p103 = por %p101, %p102
    %p104 = scmp.ne.s32.totalorder %s93, %s94
    %p105 = scmp.eq.s32.totalorder %s14, 0
    %p106 = por %p104, %p105
    %p107 = scmp.ne.s32.totalorder %s93, %s94
    %p108 = scmp.eq.s32.totalorder %s15, 1
    %p109 = por %p107, %p108
    %p111 = scmp.ne.s32.totalorder %s94, %s110
    %p112 = scmp.eq.s32.totalorder %s15, 0
    %p113 = por %p111, %p112
    %s114 = ssub.s32 %s16, %s35
    %s115 = ssub.s32 %s18, %s27
    %s116 = sor.u32 %s114, %s115
    %s117 = ssub.s32 %s17, %s31
    %s118 = sor.u32 %s116, %s117
    %p119 = scmp.eq.s32.totalorder %s118, 0
    %s121 = sadd.s32 %s120, 1
    %s122 = scalar_select %p119, %s120, %s121
    %p125 = pneg %p119
    %p126 = scmp.eq.s32.totalorder %s9, 1
    %p127 = por %p125, %p126
    %p128 = scmp.ne.s32.totalorder %s120, %s123
    %p129 = scmp.eq.s32.totalorder %s9, 0
    %p130 = por %p128, %p129
    %p131 = scmp.ne.s32.totalorder %s120, %s123
    %p132 = scmp.eq.s32.totalorder %s14, 1
    %p133 = por %p131, %p132
    %p134 = scmp.ne.s32.totalorder %s123, %s124
    %p135 = scmp.eq.s32.totalorder %s14, 0
    %p136 = por %p134, %p135
    %p137 = scmp.ne.s32.totalorder %s123, %s124
    %p138 = scmp.eq.s32.totalorder %s15, 1
    %p139 = por %p137, %p138
    %p141 = scmp.ne.s32.totalorder %s124, %s140
    %p142 = scmp.eq.s32.totalorder %s15, 0
    %p143 = por %p141, %p142
    %p144 = scmp.le.s32.totalorder 1, %s9
    %p145 = scmp.lt.s32.totalorder %s9, 3
    %p146 = pnand %p144, %p145
    %p147 = pneg %p146
    // Predicated region
    $region9: #{conv_bn_silu.1} parent=5 // pred_check
      _
    $region10: #{conv_bn_silu.1} parent=5 // pred_check_branch
      %149 = sbr.rel (%p146) target = $region12
    $region11: #{conv_bn_silu.1} parent=5 // pred_region
      %s150 = ssub.s32 %s9, 1
      // Predicated region
      $region13: #{conv_bn_silu.1} parent=11 // pred_check
        %p151 = pneg %p80
      $region14: #{conv_bn_silu.1} parent=11 // pred_check_branch
        %153 = sbr.rel (%p151) target = $region16
      $region15: #{conv_bn_silu.1} parent=11 // pred_region
        %p154 = scmp.lt.s32.totalorder %s20, 0
        %s155 = scalar_select %p154, %s20, 0
        %s156 = smul.addr %s155, 4
        %s157 = scalar_lea.vmem %s1, %s156
      $region16: #{conv_bn_silu.1} parent=11 // pred_fallthru
        _
      // Predicated region
      $region17: #{conv_bn_silu.1} parent=11 // pred_check
        %p158 = pneg %p106
      $region18: #{conv_bn_silu.1} parent=11 // pred_check_branch
        %160 = sbr.rel (%p158) target = $region20
      $region19: #{conv_bn_silu.1} parent=11 // pred_region
        %p161 = scmp.lt.s32.totalorder %s20, 0
        %s162 = scalar_select %p161, %s20, 0
        %s163 = scalar_lea.vmem %s2, %s162
      $region20: #{conv_bn_silu.1} parent=11 // pred_fallthru
        _
    $region12: #{conv_bn_silu.1} parent=5 // pred_fallthru
      _
    %p164 = scmp.lt.s32.totalorder %s9, 2
    // Predicated region
    $region21: #{conv_bn_silu.1} parent=5 // pred_check
      %p165 = pneg %p164
    $region22: #{conv_bn_silu.1} parent=5 // pred_check_branch
      %167 = sbr.rel (%p165) target = $region24
    $region23: #{conv_bn_silu.1} parent=5 // pred_region
      // Predicated region
      $region25: #{conv_bn_silu.1} parent=23 // pred_check
        %p168 = pneg %p48
      $region26: #{conv_bn_silu.1} parent=23 // pred_check_branch
        %170 = sbr.rel (%p168) target = $region28
      $region27: #{conv_bn_silu.1} parent=23 // pred_region
        %p171 = scmp.lt.s32.totalorder %s16, 1
        %s172 = scalar_select %p171, %s16, 1
        %s173 = smul.addr %s172, 54
        %s174 = smul.addr %s173, 4
        %s175 = scalar_lea.vmem %s0, %s174
      $region28: #{conv_bn_silu.1} parent=23 // pred_fallthru
        _
    $region24: #{conv_bn_silu.1} parent=5 // pred_fallthru
      _
    %p176 = scmp.le.s32.totalorder 1, %s9
    %p177 = scmp.lt.s32.totalorder %s9, 3
    %p178 = pnand %p176, %p177
    %p179 = pneg %p178
    // Predicated region
    $region29: #{conv_bn_silu.1} parent=5 // pred_check
      _
    $region30: #{conv_bn_silu.1} parent=5 // pred_check_branch
      %181 = sbr.rel (%p178) target = $region32
    $region31: #{conv_bn_silu.1} parent=5 // pred_region
      %s182 = ssub.s32 %s9, 1
      %p183 = scmp.lt.s32.totalorder %s19, 1
      %s184 = scalar_select %p183, %s19, 1
      %s185 = smul.addr %s184, 54
      %s186 = smul.addr %s185, 4
      %s187 = scalar_lea.vmem %s0, %s186
      %p188 = pneg %p54
      %p189 = pneg %p51
      %p190 = scmp.lt.s32.totalorder %s20, 0
      %s191 = scalar_select %p190, %s20, 0
      %s192 = smul.addr %s191, 4
      %s193 = scalar_lea.vmem %s1, %s192
      %p194 = pneg %p80
      %p195 = pneg %p77
      %p196 = scmp.lt.s32.totalorder %s20, 0
      %s197 = scalar_select %p196, %s20, 0
      %s198 = scalar_lea.vmem %s2, %s197
      %p199 = pneg %p106
      %p200 = pneg %p103
      %p201 = pneg %p136
      %p202 = pneg %p133
      %s203 = smul.u32 48, %s21
      %p204 = scmp.lt.s32.totalorder %s19, 1
      %s205 = scalar_select %p204, %s19, 1
      %p206 = scmp.lt.s32.totalorder %s203, 47
      %s207 = scalar_select %p206, %s203, 47
      %p208 = scmp.lt.s32.totalorder %s20, 0
      %s209 = scalar_select %p208, %s20, 0
      %s210 = sadd.s32 %s209, %s207
      %s211 = smul.addr %s205, 48
      %s212 = sadd.s32 %s210, %s211
      %s213 = smul.addr %s212, 8
      %s214 = scalar_lea.vmem %s3, %s213
      %p215 = scmp.lt.s32.totalorder %s19, 1
      %s216 = scalar_select %p215, %s19, 1
      %s217 = smul.addr %s216, 54
      %s218 = smul.addr %s217, 4
      %s219 = scalar_lea.vmem %s0, %s218
      %p220 = scmp.lt.s32.totalorder %s20, 0
      %s221 = scalar_select %p220, %s20, 0
      %s222 = smul.addr %s221, 4
      %s223 = scalar_lea.vmem %s1, %s222
      %p224 = scmp.lt.s32.totalorder %s20, 0
      %s225 = scalar_select %p224, %s20, 0
      %s226 = scalar_lea.vmem %s2, %s225
      %s227 = smul.u32 48, %s21
      %p228 = scmp.lt.s32.totalorder %s19, 1
      %s229 = scalar_select %p228, %s19, 1
      %p230 = scmp.lt.s32.totalorder %s227, 47
      %s231 = scalar_select %p230, %s227, 47
      %p232 = scmp.lt.s32.totalorder %s20, 0
      %s233 = scalar_select %p232, %s20, 0
      %s234 = sadd.s32 %s233, %s231
      %s235 = smul.addr %s229, 48
      %s236 = sadd.s32 %s234, %s235
      %s237 = smul.addr %s236, 8
      %s238 = scalar_lea.vmem %s3, %s237
      %s239 = smul.u32 48, %s21
      %s241 = smul.u32 %s21, 384
      %s242 = sshra.s32 %s241, 3
      %s243 = sand.u32 %s241, 7
      %s244 = smul.addr %s242, 4
      %s245 = scalar_lea.vmem %s219, %s244
      %v246 = vld [vmem:[%s245] sm:$0xf]
      %v247 = vld [vmem:[%s245 + $0x4] sm:$0xf]
      %v248 = vld [vmem:[%s245 + $0x8] sm:$0xf]
      %v249 = vld [vmem:[%s245 + $0xc] sm:$0xf]
      %v250 = vld [vmem:[%s245 + $0x10] sm:$0xf]
      %v251 = vld [vmem:[%s245 + $0x14] sm:$0xf]
      %v252 = vld [vmem:[%s245 + $0x18] sm:$0xf]
      %v253 = vld [vmem:[%s245 + $0x1c] sm:$0xf]
      %v254 = vld [vmem:[%s245 + $0x20] sm:$0xf]
      %v255 = vld [vmem:[%s245 + $0x24] sm:$0xf]
      %v256 = vld [vmem:[%s245 + $0x28] sm:$0xf]
      %v257 = vld [vmem:[%s245 + $0x2c] sm:$0xf]
      %v258 = vld [vmem:[%s245 + $0x30] sm:$0xf]
      %v259 = vld [vmem:[%s245 + $0x34] sm:$0xf]
      %v260 = vld [vmem:[%s245 + $0x38] sm:$0xf]
      %v261 = vld [vmem:[%s245 + $0x3c] sm:$0xf]
      %v262 = vld [vmem:[%s245 + $0x40] sm:$0xf]
      %v263 = vld [vmem:[%s245 + $0x44] sm:$0xf]
      %v264 = vld [vmem:[%s245 + $0x48] sm:$0xf]
      %v265 = vld [vmem:[%s245 + $0x4c] sm:$0xf]
      %v266 = vld [vmem:[%s245 + $0x50] sm:$0xf]
      %v267 = vld [vmem:[%s245 + $0x54] sm:$0xf]
      %v268 = vld [vmem:[%s245 + $0x58] sm:$0xf]
      %v269 = vld [vmem:[%s245 + $0x5c] sm:$0xf]
      %v270 = vld [vmem:[%s245 + $0x60] sm:$0xf]
      %v271 = vld [vmem:[%s245 + $0x64] sm:$0xf]
      %v272 = vld [vmem:[%s245 + $0x68] sm:$0xf]
      %v273 = vld [vmem:[%s245 + $0x6c] sm:$0xf]
      %v274 = vld [vmem:[%s245 + $0x70] sm:$0xf]
      %v275 = vld [vmem:[%s245 + $0x74] sm:$0xf]
      %v276 = vld [vmem:[%s245 + $0x78] sm:$0xf]
      %v277 = vld [vmem:[%s245 + $0x7c] sm:$0xf]
      %v278 = vld [vmem:[%s245 + $0x80] sm:$0xf]
      %v279 = vld [vmem:[%s245 + $0x84] sm:$0xf]
      %v280 = vld [vmem:[%s245 + $0x88] sm:$0xf]
      %v281 = vld [vmem:[%s245 + $0x8c] sm:$0xf]
      %v282 = vld [vmem:[%s245 + $0x90] sm:$0xf]
      %v283 = vld [vmem:[%s245 + $0x94] sm:$0xf]
      %v284 = vld [vmem:[%s245 + $0x98] sm:$0xf]
      %v285 = vld [vmem:[%s245 + $0x9c] sm:$0xf]
      %v286 = vld [vmem:[%s245 + $0xa0] sm:$0xf]
      %v287 = vld [vmem:[%s245 + $0xa4] sm:$0xf]
      %v288 = vld [vmem:[%s245 + $0xa8] sm:$0xf]
      %v289 = vld [vmem:[%s245 + $0xac] sm:$0xf]
      %v290 = vld [vmem:[%s245 + $0xb0] sm:$0xf]
      %v291 = vld [vmem:[%s245 + $0xb4] sm:$0xf]
      %v292 = vld [vmem:[%s245 + $0xb8] sm:$0xf]
      %v293 = vld [vmem:[%s245 + $0xbc] sm:$0xf]
      %v294 = vld [vmem:[%s223] sm:$0xf]
      %v295 = vld [vmem:[%s223 + $0x4] sm:$0x3]
      %s296 = sadd.s32 %s241, 24
      %s297 = sshra.s32 %s296, 3
      %s298 = sand.u32 %s296, 7
      %s299 = smul.addr %s297, 4
      %s300 = scalar_lea.vmem %s219, %s299
      %v301 = vld [vmem:[%s300] sm:$0xf]
      %v302 = vld [vmem:[%s300 + $0x4] sm:$0xf]
      %v303 = vld [vmem:[%s300 + $0x8] sm:$0xf]
      %v304 = vld [vmem:[%s300 + $0xc] sm:$0xf]
      %v305 = vld [vmem:[%s300 + $0x10] sm:$0xf]
      %v306 = vld [vmem:[%s300 + $0x14] sm:$0xf]
      %v307 = vld [vmem:[%s300 + $0x18] sm:$0xf]
      %v308 = vld [vmem:[%s300 + $0x1c] sm:$0xf]
      %v309 = vld [vmem:[%s300 + $0x20] sm:$0xf]
      %v310 = vld [vmem:[%s300 + $0x24] sm:$0xf]
      %v311 = vld [vmem:[%s300 + $0x28] sm:$0xf]
      %v312 = vld [vmem:[%s300 + $0x2c] sm:$0xf]
      %v313 = vld [vmem:[%s300 + $0x30] sm:$0xf]
      %v314 = vld [vmem:[%s300 + $0x34] sm:$0xf]
      %v315 = vld [vmem:[%s300 + $0x38] sm:$0xf]
      %v316 = vld [vmem:[%s300 + $0x3c] sm:$0xf]
      %v317 = vld [vmem:[%s300 + $0x40] sm:$0xf]
      %v318 = vld [vmem:[%s300 + $0x44] sm:$0xf]
      %v319 = vld [vmem:[%s300 + $0x48] sm:$0xf]
      %v320 = vld [vmem:[%s300 + $0x4c] sm:$0xf]
      %v321 = vld [vmem:[%s300 + $0x50] sm:$0xf]
      %v322 = vld [vmem:[%s300 + $0x54] sm:$0xf]
      %v323 = vld [vmem:[%s300 + $0x58] sm:$0xf]
      %v324 = vld [vmem:[%s300 + $0x5c] sm:$0xf]
      %v325 = vld [vmem:[%s300 + $0x60] sm:$0xf]
      %v326 = vld [vmem:[%s300 + $0x64] sm:$0xf]
      %v327 = vld [vmem:[%s300 + $0x68] sm:$0xf]
      %v328 = vld [vmem:[%s300 + $0x6c] sm:$0xf]
      %v329 = vld [vmem:[%s300 + $0x70] sm:$0xf]
      %v330 = vld [vmem:[%s300 + $0x74] sm:$0xf]
      %v331 = vld [vmem:[%s300 + $0x78] sm:$0xf]
      %v332 = vld [vmem:[%s300 + $0x7c] sm:$0xf]
      %v333 = vld [vmem:[%s300 + $0x80] sm:$0xf]
      %v334 = vld [vmem:[%s300 + $0x84] sm:$0xf]
      %v335 = vld [vmem:[%s300 + $0x88] sm:$0xf]
      %v336 = vld [vmem:[%s300 + $0x8c] sm:$0xf]
      %v337 = vld [vmem:[%s300 + $0x90] sm:$0xf]
      %v338 = vld [vmem:[%s300 + $0x94] sm:$0xf]
      %v339 = vld [vmem:[%s300 + $0x98] sm:$0xf]
      %v340 = vld [vmem:[%s300 + $0x9c] sm:$0xf]
      %v341 = vld [vmem:[%s300 + $0xa0] sm:$0xf]
      %v342 = vld [vmem:[%s300 + $0xa4] sm:$0xf]
      %v343 = vld [vmem:[%s300 + $0xa8] sm:$0xf]
      %v344 = vld [vmem:[%s300 + $0xac] sm:$0xf]
      %v345 = vld [vmem:[%s300 + $0xb0] sm:$0xf]
      %v346 = vld [vmem:[%s300 + $0xb4] sm:$0xf]
      %v347 = vld [vmem:[%s300 + $0xb8] sm:$0xf]
      %v348 = vld [vmem:[%s300 + $0xbc] sm:$0xf]
      %s349 = scalar_lea.vmem %s223, 8
      %v350 = vld [vmem:[%s349] sm:$0xf]
      %v351 = vld [vmem:[%s349 + $0x4] sm:$0x3]
      %v400 = vunpack.c.l.b16 %v301
      %v401 = vunpack.c.l.b16 %v302
      %v402 = vunpack.c.l.b16 %v303
      %v403 = vunpack.c.l.b16 %v304
      %v404 = vunpack.c.l.b16 %v305
      %v405 = vunpack.c.l.b16 %v306
      %v406 = vunpack.c.l.b16 %v307
      %v407 = vunpack.c.l.b16 %v308
      %v408 = vunpack.c.l.b16 %v309
      %v409 = vunpack.c.l.b16 %v310
      %v410 = vunpack.c.l.b16 %v311
      %v411 = vunpack.c.l.b16 %v312
      %v412 = vunpack.c.l.b16 %v313
      %v413 = vunpack.c.l.b16 %v314
      %v414 = vunpack.c.l.b16 %v315
      %v415 = vunpack.c.l.b16 %v316
      %v416 = vunpack.c.l.b16 %v317
      %v417 = vunpack.c.l.b16 %v318
      %v418 = vunpack.c.l.b16 %v319
      %v419 = vunpack.c.l.b16 %v320
      %v420 = vunpack.c.l.b16 %v321
      %v421 = vunpack.c.l.b16 %v322
      %v422 = vunpack.c.l.b16 %v323
      %v423 = vunpack.c.l.b16 %v324
      %v424 = vunpack.c.l.b16 %v325
      %v425 = vunpack.c.l.b16 %v326
      %v426 = vunpack.c.l.b16 %v327
      %v427 = vunpack.c.l.b16 %v328
      %v428 = vunpack.c.l.b16 %v329
      %v429 = vunpack.c.l.b16 %v330
      %v430 = vunpack.c.l.b16 %v331
      %v431 = vunpack.c.l.b16 %v332
      %v432 = vunpack.c.l.b16 %v333
      %v433 = vunpack.c.l.b16 %v334
      %v434 = vunpack.c.l.b16 %v335
      %v435 = vunpack.c.l.b16 %v336
      %v436 = vunpack.c.l.b16 %v337
      %v437 = vunpack.c.l.b16 %v338
      %v438 = vunpack.c.l.b16 %v339
      %v439 = vunpack.c.l.b16 %v340
      %v440 = vunpack.c.l.b16 %v341
      %v441 = vunpack.c.l.b16 %v342
      %v442 = vunpack.c.l.b16 %v343
      %v443 = vunpack.c.l.b16 %v344
      %v444 = vunpack.c.l.b16 %v345
      %v445 = vunpack.c.l.b16 %v346
      %v446 = vunpack.c.l.b16 %v347
      %v447 = vunpack.c.l.b16 %v348
      %v448 = vpack.c.b16 %v401, %v400
      %v449 = vpack.c.b16 %v403, %v402
      %v450 = vpack.c.b16 %v405, %v404
      %v451 = vpack.c.b16 %v407, %v406
      %v452 = vpack.c.b16 %v409, %v408
      %v453 = vpack.c.b16 %v411, %v410
      %v454 = vpack.c.b16 %v413, %v412
      %v455 = vpack.c.b16 %v415, %v414
      %v456 = vpack.c.b16 %v417, %v416
      %v457 = vpack.c.b16 %v419, %v418
      %v458 = vpack.c.b16 %v421, %v420
      %v459 = vpack.c.b16 %v423, %v422
      %v460 = vpack.c.b16 %v425, %v424
      %v461 = vpack.c.b16 %v427, %v426
      %v462 = vpack.c.b16 %v429, %v428
      %v463 = vpack.c.b16 %v431, %v430
      %v464 = vpack.c.b16 %v433, %v432
      %v465 = vpack.c.b16 %v435, %v434
      %v466 = vpack.c.b16 %v437, %v436
      %v467 = vpack.c.b16 %v439, %v438
      %v468 = vpack.c.b16 %v441, %v440
      %v469 = vpack.c.b16 %v443, %v442
      %v470 = vpack.c.b16 %v445, %v444
      %v471 = vpack.c.b16 %v447, %v446
      %v474 = vunpack.c.l.b16 %v350
      %v475 = vunpack.c.l.b16 %v351
      %v476 = vpack.c.b16 %v475, %v474
      %vm477 = vcmask 97280
      %v479 = vsel %vm477, %v448, 0
      %v482 = vsel %vm477, %v449, 0
      %v485 = vsel %vm477, %v450, 0
      %v488 = vsel %vm477, %v451, 0
      %v491 = vsel %vm477, %v452, 0
      %v494 = vsel %vm477, %v453, 0
      %v497 = vsel %vm477, %v454, 0
      %v500 = vsel %vm477, %v455, 0
      %v503 = vsel %vm477, %v456, 0
      %v506 = vsel %vm477, %v457, 0
      %v509 = vsel %vm477, %v458, 0
      %v512 = vsel %vm477, %v459, 0
      %v515 = vsel %vm477, %v460, 0
      %v518 = vsel %vm477, %v461, 0
      %v521 = vsel %vm477, %v462, 0
      %v524 = vsel %vm477, %v463, 0
      %v527 = vsel %vm477, %v464, 0
      %v530 = vsel %vm477, %v465, 0
      %v533 = vsel %vm477, %v466, 0
      %v536 = vsel %vm477, %v467, 0
      %v539 = vsel %vm477, %v468, 0
      %v542 = vsel %vm477, %v469, 0
      %v545 = vsel %vm477, %v470, 0
      %v548 = vsel %vm477, %v471, 0
      %vm550 = vcmask 1045504
      %v552 = vsel %vm550, %v476, 0
      %554 = vmatprep.subr.bf16.mxu0 0
      %555 = vmatpush1.bf16.msra.mxu0 %v552
      %556 = vmatprep.subr.bf16.mxu0 0
      %557 = vmatpush1.bf16.msra.mxu0 0
      %558 = vmatprep.subr.bf16.mxu0 0
      %559 = vmatpush1.bf16.msra.mxu0 0
      %560 = vmatprep.subr.bf16.mxu0 0
      %561 = vmatpush1.bf16.msra.mxu0 0
      %562 = vmatprep.subr.bf16.mxu0 0
      %563 = vmatpush1.bf16.msra.mxu0 0
      %564 = vmatprep.subr.bf16.mxu0 0
      %565 = vmatpush1.bf16.msra.mxu0 0
      %566 = vmatprep.subr.bf16.mxu0 0
      %567 = vmatpush1.bf16.msra.mxu0 0
      %568 = vmatprep.subr.bf16.mxu0 0
      %569 = vmatpush1.bf16.msra.mxu0 0
      %570 = vmatprep.subr.bf16.mxu0 0
      %571 = vmatpush1.bf16.msra.mxu0 0
      %572 = vmatprep.subr.bf16.mxu0 0
      %573 = vmatpush1.bf16.msra.mxu0 0
      %574 = vmatprep.subr.bf16.mxu0 0
      %575 = vmatpush1.bf16.msra.mxu0 0
      %576 = vmatprep.subr.bf16.mxu0 0
      %577 = vmatpush1.bf16.msra.mxu0 0
      %578 = vmatprep.subr.bf16.mxu0 0
      %579 = vmatpush1.bf16.msra.mxu0 0
      %580 = vmatprep.subr.bf16.mxu0 0
      %581 = vmatpush1.bf16.msra.mxu0 0
      %582 = vmatprep.subr.bf16.mxu0 0
      %583 = vmatpush1.bf16.msra.mxu0 0
      %584 = vmatprep.subr.bf16.mxu0 0
      %585 = vmatpush1.bf16.msra.mxu0 0
      %586 = vmatprep.mubr.bf16.mxu0 0
      %587 = vmatmul.mubr.bf16.gmra.mrb[0].mxu0 %v479
      %v588 = vpop.f32.mrb[0].mxu0
      %v589 = vadd.f32 0.0, %v588
      %v590 = vpop.f32.mrb[0].mxu0
      %v591 = vpop.f32.mrb[0].mxu0
      %v592 = vadd.f32 0.0, %v591
      %v593 = vpop.f32.mrb[0].mxu0
      %594 = vmatprep.mubr.bf16.mxu0 0
      %595 = vmatmul.mubr.bf16.gmra.mrb[0].mxu0 %v482
      %v596 = vpop.f32.mrb[0].mxu0
      %v597 = vadd.f32 0.0, %v596
      %v598 = vpop.f32.mrb[0].mxu0
      %v599 = vpop.f32.mrb[0].mxu0
      %v600 = vadd.f32 0.0, %v599
      %v601 = vpop.f32.mrb[0].mxu0
      %602 = vmatprep.mubr.bf16.mxu0 0
      %603 = vmatmul.mubr.bf16.gmra.mrb[0].mxu0 %v485
      %v604 = vpop.f32.mrb[0].mxu0
      %v605 = vadd.f32 0.0, %v604
      %v606 = vpop.f32.mrb[0].mxu0
      %v607 = vpop.f32.mrb[0].mxu0
      %v608 = vadd.f32 0.0, %v607
      %v609 = vpop.f32.mrb[0].mxu0
      %610 = vmatprep.mubr.bf16.mxu0 0
      %611 = vmatmul.mubr.bf16.gmra.mrb[0].mxu0 %v488
      %v612 = vpop.f32.mrb[0].mxu0
      %v613 = vadd.f32 0.0, %v612
      %v614 = vpop.f32.mrb[0].mxu0
      %v615 = vpop.f32.mrb[0].mxu0
      %v616 = vadd.f32 0.0, %v615
      %v617 = vpop.f32.mrb[0].mxu0
      %618 = vmatprep.mubr.bf16.mxu0 0
      %619 = vmatmul.mubr.bf16.gmra.mrb[0].mxu0 %v491
      %v620 = vpop.f32.mrb[0].mxu0
      %v621 = vadd.f32 0.0, %v620
      %v622 = vpop.f32.mrb[0].mxu0
      %v623 = vpop.f32.mrb[0].mxu0
      %v624 = vadd.f32 0.0, %v623
      %v625 = vpop.f32.mrb[0].mxu0
      %626 = vmatprep.mubr.bf16.mxu0 0
      %627 = vmatmul.mubr.bf16.gmra.mrb[0].mxu0 %v494
      %v628 = vpop.f32.mrb[0].mxu0
      %v629 = vadd.f32 0.0, %v628
      %v630 = vpop.f32.mrb[0].mxu0
      %v631 = vpop.f32.mrb[0].mxu0
      %v632 = vadd.f32 0.0, %v631
      %v633 = vpop.f32.mrb[0].mxu0
      %634 = vmatprep.mubr.bf16.mxu0 0
      %635 = vmatmul.mubr.bf16.gmra.mrb[0].mxu0 %v497
      %v636 = vpop.f32.mrb[0].mxu0
      %v637 = vadd.f32 0.0, %v636
      %v638 = vpop.f32.mrb[0].mxu0
      %v639 = vpop.f32.mrb[0].mxu0
      %v640 = vadd.f32 0.0, %v639
      %v641 = vpop.f32.mrb[0].mxu0
      %642 = vmatprep.mubr.bf16.mxu0 0
      %643 = vmatmul.mubr.bf16.gmra.mrb[0].mxu0 %v500
      %v644 = vpop.f32.mrb[0].mxu0
      %v645 = vadd.f32 0.0, %v644
      %v646 = vpop.f32.mrb[0].mxu0
      %v647 = vpop.f32.mrb[0].mxu0
      %v648 = vadd.f32 0.0, %v647
      %v649 = vpop.f32.mrb[0].mxu0
      %650 = vmatprep.mubr.bf16.mxu0 0
      %651 = vmatmul.mubr.bf16.gmra.mrb[0].mxu0 %v503
      %v652 = vpop.f32.mrb[0].mxu0
      %v653 = vadd.f32 0.0, %v652
      %v654 = vpop.f32.mrb[0].mxu0
      %v655 = vpop.f32.mrb[0].mxu0
      %v656 = vadd.f32 0.0, %v655
      %v657 = vpop.f32.mrb[0].mxu0
      %658 = vmatprep.mubr.bf16.mxu0 0
      %659 = vmatmul.mubr.bf16.gmra.mrb[0].mxu0 %v506
      %v660 = vpop.f32.mrb[0].mxu0
      %v661 = vadd.f32 0.0, %v660
      %v662 = vpop.f32.mrb[0].mxu0
      %v663 = vpop.f32.mrb[0].mxu0
      %v664 = vadd.f32 0.0, %v663
      %v665 = vpop.f32.mrb[0].mxu0
      %666 = vmatprep.mubr.bf16.mxu0 0
      %667 = vmatmul.mubr.bf16.gmra.mrb[0].mxu0 %v509
      %v668 = vpop.f32.mrb[0].mxu0
      %v669 = vadd.f32 0.0, %v668
      %v670 = vpop.f32.mrb[0].mxu0
      %v671 = vpop.f32.mrb[0].mxu0
      %v672 = vadd.f32 0.0, %v671
      %v673 = vpop.f32.mrb[0].mxu0
      %674 = vmatprep.mubr.bf16.mxu0 0
      %675 = vmatmul.mubr.bf16.gmra.mrb[0].mxu0 %v512
      %v676 = vpop.f32.mrb[0].mxu0
      %v677 = vadd.f32 0.0, %v676
      %v678 = vpop.f32.mrb[0].mxu0
      %v679 = vpop.f32.mrb[0].mxu0
      %v680 = vadd.f32 0.0, %v679
      %v681 = vpop.f32.mrb[0].mxu0
      %682 = vmatprep.mubr.bf16.mxu0 0
      %683 = vmatmul.mubr.bf16.gmra.mrb[0].mxu0 %v515
      %v684 = vpop.f32.mrb[0].mxu0
      %v685 = vadd.f32 0.0, %v684
      %v686 = vpop.f32.mrb[0].mxu0
      %v687 = vpop.f32.mrb[0].mxu0
      %v688 = vadd.f32 0.0, %v687
      %v689 = vpop.f32.mrb[0].mxu0
      %690 = vmatprep.mubr.bf16.mxu0 0
      %691 = vmatmul.mubr.bf16.gmra.mrb[0].mxu0 %v518
      %v692 = vpop.f32.mrb[0].mxu0
      %v693 = vadd.f32 0.0, %v692
      %v694 = vpop.f32.mrb[0].mxu0
      %v695 = vpop.f32.mrb[0].mxu0
      %v696 = vadd.f32 0.0, %v695
      %v697 = vpop.f32.mrb[0].mxu0
      %698 = vmatprep.mubr.bf16.mxu0 0
      %699 = vmatmul.mubr.bf16.gmra.mrb[0].mxu0 %v521
      %v700 = vpop.f32.mrb[0].mxu0
      %v701 = vadd.f32 0.0, %v700
      %v702 = vpop.f32.mrb[0].mxu0
      %v703 = vpop.f32.mrb[0].mxu0
      %v704 = vadd.f32 0.0, %v703
      %v705 = vpop.f32.mrb[0].mxu0
      %706 = vmatprep.mubr.bf16.mxu0 0
      %707 = vmatmul.mubr.bf16.gmra.mrb[0].mxu0 %v524
      %v708 = vpop.f32.mrb[0].mxu0
      %v709 = vadd.f32 0.0, %v708
      %v710 = vpop.f32.mrb[0].mxu0
      %v711 = vpop.f32.mrb[0].mxu0
      %v712 = vadd.f32 0.0, %v711
      %v713 = vpop.f32.mrb[0].mxu0
      %714 = vmatprep.mubr.bf16.mxu0 0
      %715 = vmatmul.mubr.bf16.gmra.mrb[0].mxu0 %v527
      %v716 = vpop.f32.mrb[0].mxu0
      %v717 = vadd.f32 0.0, %v716
      %v718 = vpop.f32.mrb[0].mxu0
      %v719 = vpop.f32.mrb[0].mxu0
      %v720 = vadd.f32 0.0, %v719
      %v721 = vpop.f32.mrb[0].mxu0
      %722 = vmatprep.mubr.bf16.mxu0 0
      %723 = vmatmul.mubr.bf16.gmra.mrb[0].mxu0 %v530
      %v724 = vpop.f32.mrb[0].mxu0
      %v725 = vadd.f32 0.0, %v724
      %v726 = vpop.f32.mrb[0].mxu0
      %v727 = vpop.f32.mrb[0].mxu0
      %v728 = vadd.f32 0.0, %v727
      %v729 = vpop.f32.mrb[0].mxu0
      %730 = vmatprep.mubr.bf16.mxu0 0
      %731 = vmatmul.mubr.bf16.gmra.mrb[0].mxu0 %v533
      %v732 = vpop.f32.mrb[0].mxu0
      %v733 = vadd.f32 0.0, %v732
      %v734 = vpop.f32.mrb[0].mxu0
      %v735 = vpop.f32.mrb[0].mxu0
      %v736 = vadd.f32 0.0, %v735
      %v737 = vpop.f32.mrb[0].mxu0
      %738 = vmatprep.mubr.bf16.mxu0 0
      %739 = vmatmul.mubr.bf16.gmra.mrb[0].mxu0 %v536
      %v740 = vpop.f32.mrb[0].mxu0
      %v741 = vadd.f32 0.0, %v740
      %v742 = vpop.f32.mrb[0].mxu0
      %v743 = vpop.f32.mrb[0].mxu0
      %v744 = vadd.f32 0.0, %v743
      %v745 = vpop.f32.mrb[0].mxu0
      %746 = vmatprep.mubr.bf16.mxu0 0
      %747 = vmatmul.mubr.bf16.gmra.mrb[0].mxu0 %v539
      %v748 = vpop.f32.mrb[0].mxu0
      %v749 = vadd.f32 0.0, %v748
      %v750 = vpop.f32.mrb[0].mxu0
      %v751 = vpop.f32.mrb[0].mxu0
      %v752 = vadd.f32 0.0, %v751
      %v753 = vpop.f32.mrb[0].mxu0
      %754 = vmatprep.mubr.bf16.mxu0 0
      %755 = vmatmul.mubr.bf16.gmra.mrb[0].mxu0 %v542
      %v756 = vpop.f32.mrb[0].mxu0
      %v757 = vadd.f32 0.0, %v756
      %v758 = vpop.f32.mrb[0].mxu0
      %v759 = vpop.f32.mrb[0].mxu0
      %v760 = vadd.f32 0.0, %v759
      %v761 = vpop.f32.mrb[0].mxu0
      %762 = vmatprep.mubr.bf16.mxu0 0
      %763 = vmatmul.mubr.bf16.gmra.mrb[0].mxu0 %v545
      %v764 = vpop.f32.mrb[0].mxu0
      %v765 = vadd.f32 0.0, %v764
      %v766 = vpop.f32.mrb[0].mxu0
      %v767 = vpop.f32.mrb[0].mxu0
      %v768 = vadd.f32 0.0, %v767
      %v769 = vpop.f32.mrb[0].mxu0
      %770 = vmatprep.mubr.bf16.mxu0 0
      %771 = vmatmul.mubr.bf16.gmra.mrb[0].mxu0 %v548
      %v772 = vpop.f32.mrb[0].mxu0
      %v773 = vadd.f32 0.0, %v772
      %v774 = vpop.f32.mrb[0].mxu0
      %v775 = vpop.f32.mrb[0].mxu0
      %v776 = vadd.f32 0.0, %v775
      %v777 = vpop.f32.mrb[0].mxu0
      %778 = vdwg.mxu0
      %v827 = vunpack.c.l.b16 %v246
      %v828 = vunpack.c.l.b16 %v247
      %v829 = vunpack.c.l.b16 %v248
      %v830 = vunpack.c.l.b16 %v249
      %v831 = vunpack.c.l.b16 %v250
      %v832 = vunpack.c.l.b16 %v251
      %v833 = vunpack.c.l.b16 %v252
      %v834 = vunpack.c.l.b16 %v253
      %v835 = vunpack.c.l.b16 %v254
      %v836 = vunpack.c.l.b16 %v255
      %v837 = vunpack.c.l.b16 %v256
      %v838 = vunpack.c.l.b16 %v257
      %v839 = vunpack.c.l.b16 %v258
      %v840 = vunpack.c.l.b16 %v259
      %v841 = vunpack.c.l.b16 %v260
      %v842 = vunpack.c.l.b16 %v261
      %v843 = vunpack.c.l.b16 %v262
      %v844 = vunpack.c.l.b16 %v263
      %v845 = vunpack.c.l.b16 %v264
      %v846 = vunpack.c.l.b16 %v265
      %v847 = vunpack.c.l.b16 %v266
      %v848 = vunpack.c.l.b16 %v267
      %v849 = vunpack.c.l.b16 %v268
      %v850 = vunpack.c.l.b16 %v269
      %v851 = vunpack.c.l.b16 %v270
      %v852 = vunpack.c.l.b16 %v271
      %v853 = vunpack.c.l.b16 %v272
      %v854 = vunpack.c.l.b16 %v273
      %v855 = vunpack.c.l.b16 %v274
      %v856 = vunpack.c.l.b16 %v275
      %v857 = vunpack.c.l.b16 %v276
      %v858 = vunpack.c.l.b16 %v277
      %v859 = vunpack.c.l.b16 %v278
      %v860 = vunpack.c.l.b16 %v279
      %v861 = vunpack.c.l.b16 %v280
      %v862 = vunpack.c.l.b16 %v281
      %v863 = vunpack.c.l.b16 %v282
      %v864 = vunpack.c.l.b16 %v283
      %v865 = vunpack.c.l.b16 %v284
      %v866 = vunpack.c.l.b16 %v285
      %v867 = vunpack.c.l.b16 %v286
      %v868 = vunpack.c.l.b16 %v287
      %v869 = vunpack.c.l.b16 %v288
      %v870 = vunpack.c.l.b16 %v289
      %v871 = vunpack.c.l.b16 %v290
      %v872 = vunpack.c.l.b16 %v291
      %v873 = vunpack.c.l.b16 %v292
      %v874 = vunpack.c.l.b16 %v293
      %v875 = vpack.c.b16 %v828, %v827
      %v876 = vpack.c.b16 %v830, %v829
      %v877 = vpack.c.b16 %v832, %v831
      %v878 = vpack.c.b16 %v834, %v833
      %v879 = vpack.c.b16 %v836, %v835
      %v880 = vpack.c.b16 %v838, %v837
      %v881 = vpack.c.b16 %v840, %v839
      %v882 = vpack.c.b16 %v842, %v841
      %v883 = vpack.c.b16 %v844, %v843
      %v884 = vpack.c.b16 %v846, %v845
      %v885 = vpack.c.b16 %v848, %v847
      %v886 = vpack.c.b16 %v850, %v849
      %v887 = vpack.c.b16 %v852, %v851
      %v888 = vpack.c.b16 %v854, %v853
      %v889 = vpack.c.b16 %v856, %v855
      %v890 = vpack.c.b16 %v858, %v857
      %v891 = vpack.c.b16 %v860, %v859
      %v892 = vpack.c.b16 %v862, %v861
      %v893 = vpack.c.b16 %v864, %v863
      %v894 = vpack.c.b16 %v866, %v865
      %v895 = vpack.c.b16 %v868, %v867
      %v896 = vpack.c.b16 %v870, %v869
      %v897 = vpack.c.b16 %v872, %v871
      %v898 = vpack.c.b16 %v874, %v873
      %v901 = vunpack.c.l.b16 %v294
      %v902 = vunpack.c.l.b16 %v295
      %v903 = vpack.c.b16 %v902, %v901
      %v905 = vsel %vm477, %v875, 0
      %v908 = vsel %vm477, %v876, 0
      %v911 = vsel %vm477, %v877, 0
      %v914 = vsel %vm477, %v878, 0
      %v917 = vsel %vm477, %v879, 0
      %v920 = vsel %vm477, %v880, 0
      %v923 = vsel %vm477, %v881, 0
      %v926 = vsel %vm477, %v882, 0
      %v929 = vsel %vm477, %v883, 0
      %v932 = vsel %vm477, %v884, 0
      %v935 = vsel %vm477, %v885, 0
      %v938 = vsel %vm477, %v886, 0
      %v941 = vsel %vm477, %v887, 0
      %v944 = vsel %vm477, %v888, 0
      %v947 = vsel %vm477, %v889, 0
      %v950 = vsel %vm477, %v890, 0
      %v953 = vsel %vm477, %v891, 0
      %v956 = vsel %vm477, %v892, 0
      %v959 = vsel %vm477, %v893, 0
      %v962 = vsel %vm477, %v894, 0
      %v965 = vsel %vm477, %v895, 0
      %v968 = vsel %vm477, %v896, 0
      %v971 = vsel %vm477, %v897, 0
      %v974 = vsel %vm477, %v898, 0
      %v977 = vsel %vm550, %v903, 0
      %979 = vmatprep.subr.bf16.mxu0 0
      %980 = vmatpush1.bf16.msra.mxu0 %v977
      %981 = vmatprep.subr.bf16.mxu0 0
      %982 = vmatpush1.bf16.msra.mxu0 0
      %983 = vmatprep.subr.bf16.mxu0 0
      %984 = vmatpush1.bf16.msra.mxu0 0
      %985 = vmatprep.subr.bf16.mxu0 0
      %986 = vmatpush1.bf16.msra.mxu0 0
      %987 = vmatprep.subr.bf16.mxu0 0
      %988 = vmatpush1.bf16.msra.mxu0 0
      %989 = vmatprep.subr.bf16.mxu0 0
      %990 = vmatpush1.bf16.msra.mxu0 0
      %991 = vmatprep.subr.bf16.mxu0 0
      %992 = vmatpush1.bf16.msra.mxu0 0
      %993 = vmatprep.subr.bf16.mxu0 0
      %994 = vmatpush1.bf16.msra.mxu0 0
      %995 = vmatprep.subr.bf16.mxu0 0
      %996 = vmatpush1.bf16.msra.mxu0 0
      %997 = vmatprep.subr.bf16.mxu0 0
      %998 = vmatpush1.bf16.msra.mxu0 0
      %999 = vmatprep.subr.bf16.mxu0 0
      %1000 = vmatpush1.bf16.msra.mxu0 0
      %1001 = vmatprep.subr.bf16.mxu0 0
      %1002 = vmatpush1.bf16.msra.mxu0 0
      %1003 = vmatprep.subr.bf16.mxu0 0
      %1004 = vmatpush1.bf16.msra.mxu0 0
      %1005 = vmatprep.subr.bf16.mxu0 0
      %1006 = vmatpush1.bf16.msra.mxu0 0
      %1007 = vmatprep.subr.bf16.mxu0 0
      %1008 = vmatpush1.bf16.msra.mxu0 0
      %1009 = vmatprep.subr.bf16.mxu0 0
      %1010 = vmatpush1.bf16.msra.mxu0 0
      %1011 = vmatprep.mubr.bf16.mxu0 0
      %1012 = vmatmul.mubr.bf16.gmra.mrb[0].mxu0 %v905
      %v1013 = vpop.f32.mrb[0].mxu0
      %v1014 = vadd.f32 %v589, %v1013
      %v1015 = vpop.f32.mrb[0].mxu0
      %v1016 = vpop.f32.mrb[0].mxu0
      %v1017 = vadd.f32 %v592, %v1016
      %v1018 = vpop.f32.mrb[0].mxu0
      %1019 = vmatprep.mubr.bf16.mxu0 0
      %1020 = vmatmul.mubr.bf16.gmra.mrb[0].mxu0 %v908
      %v1021 = vpop.f32.mrb[0].mxu0
      %v1022 = vadd.f32 %v597, %v1021
      %v1023 = vpop.f32.mrb[0].mxu0
      %v1024 = vpop.f32.mrb[0].mxu0
      %v1025 = vadd.f32 %v600, %v1024
      %v1026 = vpop.f32.mrb[0].mxu0
      %1027 = vmatprep.mubr.bf16.mxu0 0
      %1028 = vmatmul.mubr.bf16.gmra.mrb[0].mxu0 %v911
      %v1029 = vpop.f32.mrb[0].mxu0
      %v1030 = vadd.f32 %v605, %v1029
      %v1031 = vpop.f32.mrb[0].mxu0
      %v1032 = vpop.f32.mrb[0].mxu0
      %v1033 = vadd.f32 %v608, %v1032
      %v1034 = vpop.f32.mrb[0].mxu0
      %1035 = vmatprep.mubr.bf16.mxu0 0
      %1036 = vmatmul.mubr.bf16.gmra.mrb[0].mxu0 %v914
      %v1037 = vpop.f32.mrb[0].mxu0
      %v1038 = vadd.f32 %v613, %v1037
      %v1039 = vpop.f32.mrb[0].mxu0
      %v1040 = vpop.f32.mrb[0].mxu0
      %v1041 = vadd.f32 %v616, %v1040
      %v1042 = vpop.f32.mrb[0].mxu0
      %1043 = vmatprep.mubr.bf16.mxu0 0
      %1044 = vmatmul.mubr.bf16.gmra.mrb[0].mxu0 %v917
      %v1045 = vpop.f32.mrb[0].mxu0
      %v1046 = vadd.f32 %v621, %v1045
      %v1047 = vpop.f32.mrb[0].mxu0
      %v1048 = vpop.f32.mrb[0].mxu0
      %v1049 = vadd.f32 %v624, %v1048
      %v1050 = vpop.f32.mrb[0].mxu0
      %1051 = vmatprep.mubr.bf16.mxu0 0
      %1052 = vmatmul.mubr.bf16.gmra.mrb[0].mxu0 %v920
      %v1053 = vpop.f32.mrb[0].mxu0
      %v1054 = vadd.f32 %v629, %v1053
      %v1055 = vpop.f32.mrb[0].mxu0
      %v1056 = vpop.f32.mrb[0].mxu0
      %v1057 = vadd.f32 %v632, %v1056
      %v1058 = vpop.f32.mrb[0].mxu0
      %1059 = vmatprep.mubr.bf16.mxu0 0
      %1060 = vmatmul.mubr.bf16.gmra.mrb[0].mxu0 %v923
      %v1061 = vpop.f32.mrb[0].mxu0
      %v1062 = vadd.f32 %v637, %v1061
      %v1063 = vpop.f32.mrb[0].mxu0
      %v1064 = vpop.f32.mrb[0].mxu0
      %v1065 = vadd.f32 %v640, %v1064
      %v1066 = vpop.f32.mrb[0].mxu0
      %1067 = vmatprep.mubr.bf16.mxu0 0
      %1068 = vmatmul.mubr.bf16.gmra.mrb[0].mxu0 %v926
      %v1069 = vpop.f32.mrb[0].mxu0
      %v1070 = vadd.f32 %v645, %v1069
      %v1071 = vpop.f32.mrb[0].mxu0
      %v1072 = vpop.f32.mrb[0].mxu0
      %v1073 = vadd.f32 %v648, %v1072
      %v1074 = vpop.f32.mrb[0].mxu0
      %1075 = vmatprep.mubr.bf16.mxu0 0
      %1076 = vmatmul.mubr.bf16.gmra.mrb[0].mxu0 %v929
      %v1077 = vpop.f32.mrb[0].mxu0
      %v1078 = vadd.f32 %v653, %v1077
      %v1079 = vpop.f32.mrb[0].mxu0
      %v1080 = vpop.f32.mrb[0].mxu0
      %v1081 = vadd.f32 %v656, %v1080
      %v1082 = vpop.f32.mrb[0].mxu0
      %1083 = vmatprep.mubr.bf16.mxu0 0
      %1084 = vmatmul.mubr.bf16.gmra.mrb[0].mxu0 %v932
      %v1085 = vpop.f32.mrb[0].mxu0
      %v1086 = vadd.f32 %v661, %v1085
      %v1087 = vpop.f32.mrb[0].mxu0
      %v1088 = vpop.f32.mrb[0].mxu0
      %v1089 = vadd.f32 %v664, %v1088
      %v1090 = vpop.f32.mrb[0].mxu0
      %1091 = vmatprep.mubr.bf16.mxu0 0
      %1092 = vmatmul.mubr.bf16.gmra.mrb[0].mxu0 %v935
      %v1093 = vpop.f32.mrb[0].mxu0
      %v1094 = vadd.f32 %v669, %v1093
      %v1095 = vpop.f32.mrb[0].mxu0
      %v1096 = vpop.f32.mrb[0].mxu0
      %v1097 = vadd.f32 %v672, %v1096
      %v1098 = vpop.f32.mrb[0].mxu0
      %1099 = vmatprep.mubr.bf16.mxu0 0
      %1100 = vmatmul.mubr.bf16.gmra.mrb[0].mxu0 %v938
      %v1101 = vpop.f32.mrb[0].mxu0
      %v1102 = vadd.f32 %v677, %v1101
      %v1103 = vpop.f32.mrb[0].mxu0
      %v1104 = vpop.f32.mrb[0].mxu0
      %v1105 = vadd.f32 %v680, %v1104
      %v1106 = vpop.f32.mrb[0].mxu0
      %1107 = vmatprep.mubr.bf16.mxu0 0
      %1108 = vmatmul.mubr.bf16.gmra.mrb[0].mxu0 %v941
      %v1109 = vpop.f32.mrb[0].mxu0
      %v1110 = vadd.f32 %v685, %v1109
      %v1111 = vpop.f32.mrb[0].mxu0
      %v1112 = vpop.f32.mrb[0].mxu0
      %v1113 = vadd.f32 %v688, %v1112
      %v1114 = vpop.f32.mrb[0].mxu0
      %1115 = vmatprep.mubr.bf16.mxu0 0
      %1116 = vmatmul.mubr.bf16.gmra.mrb[0].mxu0 %v944
      %v1117 = vpop.f32.mrb[0].mxu0
      %v1118 = vadd.f32 %v693, %v1117
      %v1119 = vpop.f32.mrb[0].mxu0
      %v1120 = vpop.f32.mrb[0].mxu0
      %v1121 = vadd.f32 %v696, %v1120
      %v1122 = vpop.f32.mrb[0].mxu0
      %1123 = vmatprep.mubr.bf16.mxu0 0
      %1124 = vmatmul.mubr.bf16.gmra.mrb[0].mxu0 %v947
      %v1125 = vpop.f32.mrb[0].mxu0
      %v1126 = vadd.f32 %v701, %v1125
      %v1127 = vpop.f32.mrb[0].mxu0
      %v1128 = vpop.f32.mrb[0].mxu0
      %v1129 = vadd.f32 %v704, %v1128
      %v1130 = vpop.f32.mrb[0].mxu0
      %1131 = vmatprep.mubr.bf16.mxu0 0
      %1132 = vmatmul.mubr.bf16.gmra.mrb[0].mxu0 %v950
      %v1133 = vpop.f32.mrb[0].mxu0
      %v1134 = vadd.f32 %v709, %v1133
      %v1135 = vpop.f32.mrb[0].mxu0
      %v1136 = vpop.f32.mrb[0].mxu0
      %v1137 = vadd.f32 %v712, %v1136
      %v1138 = vpop.f32.mrb[0].mxu0
      %1139 = vmatprep.mubr.bf16.mxu0 0
      %1140 = vmatmul.mubr.bf16.gmra.mrb[0].mxu0 %v953
      %v1141 = vpop.f32.mrb[0].mxu0
      %v1142 = vadd.f32 %v717, %v1141
      %v1143 = vpop.f32.mrb[0].mxu0
      %v1144 = vpop.f32.mrb[0].mxu0
      %v1145 = vadd.f32 %v720, %v1144
      %v1146 = vpop.f32.mrb[0].mxu0
      %1147 = vmatprep.mubr.bf16.mxu0 0
      %1148 = vmatmul.mubr.bf16.gmra.mrb[0].mxu0 %v956
      %v1149 = vpop.f32.mrb[0].mxu0
      %v1150 = vadd.f32 %v725, %v1149
      %v1151 = vpop.f32.mrb[0].mxu0
      %v1152 = vpop.f32.mrb[0].mxu0
      %v1153 = vadd.f32 %v728, %v1152
      %v1154 = vpop.f32.mrb[0].mxu0
      %1155 = vmatprep.mubr.bf16.mxu0 0
      %1156 = vmatmul.mubr.bf16.gmra.mrb[0].mxu0 %v959
      %v1157 = vpop.f32.mrb[0].mxu0
      %v1158 = vadd.f32 %v733, %v1157
      %v1159 = vpop.f32.mrb[0].mxu0
      %v1160 = vpop.f32.mrb[0].mxu0
      %v1161 = vadd.f32 %v736, %v1160
      %v1162 = vpop.f32.mrb[0].mxu0
      %1163 = vmatprep.mubr.bf16.mxu0 0
      %1164 = vmatmul.mubr.bf16.gmra.mrb[0].mxu0 %v962
      %v1165 = vpop.f32.mrb[0].mxu0
      %v1166 = vadd.f32 %v741, %v1165
      %v1167 = vpop.f32.mrb[0].mxu0
      %v1168 = vpop.f32.mrb[0].mxu0
      %v1169 = vadd.f32 %v744, %v1168
      %v1170 = vpop.f32.mrb[0].mxu0
      %1171 = vmatprep.mubr.bf16.mxu0 0
      %1172 = vmatmul.mubr.bf16.gmra.mrb[0].mxu0 %v965
      %v1173 = vpop.f32.mrb[0].mxu0
      %v1174 = vadd.f32 %v749, %v1173
      %v1175 = vpop.f32.mrb[0].mxu0
      %v1176 = vpop.f32.mrb[0].mxu0
      %v1177 = vadd.f32 %v752, %v1176
      %v1178 = vpop.f32.mrb[0].mxu0
      %1179 = vmatprep.mubr.bf16.mxu0 0
      %1180 = vmatmul.mubr.bf16.gmra.mrb[0].mxu0 %v968
      %v1181 = vpop.f32.mrb[0].mxu0
      %v1182 = vadd.f32 %v757, %v1181
      %v1183 = vpop.f32.mrb[0].mxu0
      %v1184 = vpop.f32.mrb[0].mxu0
      %v1185 = vadd.f32 %v760, %v1184
      %v1186 = vpop.f32.mrb[0].mxu0
      %1187 = vmatprep.mubr.bf16.mxu0 0
      %1188 = vmatmul.mubr.bf16.gmra.mrb[0].mxu0 %v971
      %v1189 = vpop.f32.mrb[0].mxu0
      %v1190 = vadd.f32 %v765, %v1189
      %v1191 = vpop.f32.mrb[0].mxu0
      %v1192 = vpop.f32.mrb[0].mxu0
      %v1193 = vadd.f32 %v768, %v1192
      %v1194 = vpop.f32.mrb[0].mxu0
      %1195 = vmatprep.mubr.bf16.mxu0 0
      %1196 = vmatmul.mubr.bf16.gmra.mrb[0].mxu0 %v974
      %v1197 = vpop.f32.mrb[0].mxu0
      %v1198 = vadd.f32 %v773, %v1197
      %v1199 = vpop.f32.mrb[0].mxu0
      %v1200 = vpop.f32.mrb[0].mxu0
      %v1201 = vadd.f32 %v776, %v1200
      %v1202 = vpop.f32.mrb[0].mxu0
      %1203 = vdwg.mxu0
      %s1204 = sadd.s32 %s241, 48
      %s1205 = sshra.s32 %s1204, 3
      %s1206 = sand.u32 %s1204, 7
      %s1207 = smul.addr %s1205, 4
      %s1208 = scalar_lea.vmem %s219, %s1207
      %v1209 = vld [vmem:[%s1208] sm:$0xf]
      %v1210 = vld [vmem:[%s1208 + $0x4] sm:$0xf]
      %v1211 = vld [vmem:[%s1208 + $0x8] sm:$0xf]
      %v1212 = vld [vmem:[%s1208 + $0xc] sm:$0xf]
      %v1213 = vld [vmem:[%s1208 + $0x10] sm:$0xf]
      %v1214 = vld [vmem:[%s1208 + $0x14] sm:$0xf]
      %v1215 = vld [vmem:[%s1208 + $0x18] sm:$0xf]
      %v1216 = vld [vmem:[%s1208 + $0x1c] sm:$0xf]
      %v1217 = vld [vmem:[%s1208 + $0x20] sm:$0xf]
      %v1218 = vld [vmem:[%s1208 + $0x24] sm:$0xf]
      %v1219 = vld [vmem:[%s1208 + $0x28] sm:$0xf]
      %v1220 = vld [vmem:[%s1208 + $0x2c] sm:$0xf]
      %v1221 = vld [vmem:[%s1208 + $0x30] sm:$0xf]
      %v1222 = vld [vmem:[%s1208 + $0x34] sm:$0xf]
      %v1223 = vld [vmem:[%s1208 + $0x38] sm:$0xf]
      %v1224 = vld [vmem:[%s1208 + $0x3c] sm:$0xf]
      %v1225 = vld [vmem:[%s1208 + $0x40] sm:$0xf]
      %v1226 = vld [vmem:[%s1208 + $0x44] sm:$0xf]
      %v1227 = vld [vmem:[%s1208 + $0x48] sm:$0xf]
      %v1228 = vld [vmem:[%s1208 + $0x4c] sm:$0xf]
      %v1229 = vld [vmem:[%s1208 + $0x50] sm:$0xf]
      %v1230 = vld [vmem:[%s1208 + $0x54] sm:$0xf]
      %v1231 = vld [vmem:[%s1208 + $0x58] sm:$0xf]
      %v1232 = vld [vmem:[%s1208 + $0x5c] sm:$0xf]
      %v1233 = vld [vmem:[%s1208 + $0x60] sm:$0xf]
      %v1234 = vld [vmem:[%s1208 + $0x64] sm:$0xf]
      %v1235 = vld [vmem:[%s1208 + $0x68] sm:$0xf]
      %v1236 = vld [vmem:[%s1208 + $0x6c] sm:$0xf]
      %v1237 = vld [vmem:[%s1208 + $0x70] sm:$0xf]
      %v1238 = vld [vmem:[%s1208 + $0x74] sm:$0xf]
      %v1239 = vld [vmem:[%s1208 + $0x78] sm:$0xf]
      %v1240 = vld [vmem:[%s1208 + $0x7c] sm:$0xf]
      %v1241 = vld [vmem:[%s1208 + $0x80] sm:$0xf]
      %v1242 = vld [vmem:[%s1208 + $0x84] sm:$0xf]
      %v1243 = vld [vmem:[%s1208 + $0x88] sm:$0xf]
      %v1244 = vld [vmem:[%s1208 + $0x8c] sm:$0xf]
      %v1245 = vld [vmem:[%s1208 + $0x90] sm:$0xf]
      %v1246 = vld [vmem:[%s1208 + $0x94] sm:$0xf]
      %v1247 = vld [vmem:[%s1208 + $0x98] sm:$0xf]
      %v1248 = vld [vmem:[%s1208 + $0x9c] sm:$0xf]
      %v1249 = vld [vmem:[%s1208 + $0xa0] sm:$0xf]
      %v1250 = vld [vmem:[%s1208 + $0xa4] sm:$0xf]
      %v1251 = vld [vmem:[%s1208 + $0xa8] sm:$0xf]
      %v1252 = vld [vmem:[%s1208 + $0xac] sm:$0xf]
      %v1253 = vld [vmem:[%s1208 + $0xb0] sm:$0xf]
      %v1254 = vld [vmem:[%s1208 + $0xb4] sm:$0xf]
      %v1255 = vld [vmem:[%s1208 + $0xb8] sm:$0xf]
      %v1256 = vld [vmem:[%s1208 + $0xbc] sm:$0xf]
      %s1257 = scalar_lea.vmem %s223, 16
      %v1258 = vld [vmem:[%s1257] sm:$0xf]
      %v1259 = vld [vmem:[%s1257 + $0x4] sm:$0x3]
      %v1308 = vunpack.c.l.b16 %v1209
      %v1309 = vunpack.c.l.b16 %v1210
      %v1310 = vunpack.c.l.b16 %v1211
      %v1311 = vunpack.c.l.b16 %v1212
      %v1312 = vunpack.c.l.b16 %v1213
      %v1313 = vunpack.c.l.b16 %v1214
      %v1314 = vunpack.c.l.b16 %v1215
      %v1315 = vunpack.c.l.b16 %v1216
      %v1316 = vunpack.c.l.b16 %v1217
      %v1317 = vunpack.c.l.b16 %v1218
      %v1318 = vunpack.c.l.b16 %v1219
      %v1319 = vunpack.c.l.b16 %v1220
      %v1320 = vunpack.c.l.b16 %v1221
      %v1321 = vunpack.c.l.b16 %v1222
      %v1322 = vunpack.c.l.b16 %v1223
      %v1323 = vunpack.c.l.b16 %v1224
      %v1324 = vunpack.c.l.b16 %v1225
      %v1325 = vunpack.c.l.b16 %v1226
      %v1326 = vunpack.c.l.b16 %v1227
      %v1327 = vunpack.c.l.b16 %v1228
      %v1328 = vunpack.c.l.b16 %v1229
      %v1329 = vunpack.c.l.b16 %v1230
      %v1330 = vunpack.c.l.b16 %v1231
      %v1331 = vunpack.c.l.b16 %v1232
      %v1332 = vunpack.c.l.b16 %v1233
      %v1333 = vunpack.c.l.b16 %v1234
      %v1334 = vunpack.c.l.b16 %v1235
      %v1335 = vunpack.c.l.b16 %v1236
      %v1336 = vunpack.c.l.b16 %v1237
      %v1337 = vunpack.c.l.b16 %v1238
      %v1338 = vunpack.c.l.b16 %v1239
      %v1339 = vunpack.c.l.b16 %v1240
      %v1340 = vunpack.c.l.b16 %v1241
      %v1341 = vunpack.c.l.b16 %v1242
      %v1342 = vunpack.c.l.b16 %v1243
      %v1343 = vunpack.c.l.b16 %v1244
      %v1344 = vunpack.c.l.b16 %v1245
      %v1345 = vunpack.c.l.b16 %v1246
      %v1346 = vunpack.c.l.b16 %v1247
      %v1347 = vunpack.c.l.b16 %v1248
      %v1348 = vunpack.c.l.b16 %v1249
      %v1349 = vunpack.c.l.b16 %v1250
      %v1350 = vunpack.c.l.b16 %v1251
      %v1351 = vunpack.c.l.b16 %v1252
      %v1352 = vunpack.c.l.b16 %v1253
      %v1353 = vunpack.c.l.b16 %v1254
      %v1354 = vunpack.c.l.b16 %v1255
      %v1355 = vunpack.c.l.b16 %v1256
      %v1356 = vpack.c.b16 %v1309, %v1308
      %v1357 = vpack.c.b16 %v1311, %v1310
      %v1358 = vpack.c.b16 %v1313, %v1312
      %v1359 = vpack.c.b16 %v1315, %v1314
      %v1360 = vpack.c.b16 %v1317, %v1316
      %v1361 = vpack.c.b16 %v1319, %v1318
      %v1362 = vpack.c.b16 %v1321, %v1320
      %v1363 = vpack.c.b16 %v1323, %v1322
      %v1364 = vpack.c.b16 %v1325, %v1324
      %v1365 = vpack.c.b16 %v1327, %v1326
      %v1366 = vpack.c.b16 %v1329, %v1328
      %v1367 = vpack.c.b16 %v1331, %v1330
      %v1368 = vpack.c.b16 %v1333, %v1332
      %v1369 = vpack.c.b16 %v1335, %v1334
      %v1370 = vpack.c.b16 %v1337, %v1336
      %v1371 = vpack.c.b16 %v1339, %v1338
      %v1372 = vpack.c.b16 %v1341, %v1340
      %v1373 = vpack.c.b16 %v1343, %v1342
      %v1374 = vpack.c.b16 %v1345, %v1344
      %v1375 = vpack.c.b16 %v1347, %v1346
      %v1376 = vpack.c.b16 %v1349, %v1348
      %v1377 = vpack.c.b16 %v1351, %v1350
      %v1378 = vpack.c.b16 %v1353, %v1352
      %v1379 = vpack.c.b16 %v1355, %v1354
      %v1382 = vunpack.c.l.b16 %v1258
      %v1383 = vunpack.c.l.b16 %v1259
      %v1384 = vpack.c.b16 %v1383, %v1382
      %v1386 = vsel %vm477, %v1356, 0
      %v1389 = vsel %vm477, %v1357, 0
      %v1392 = vsel %vm477, %v1358, 0
      %v1395 = vsel %vm477, %v1359, 0
      %v1398 = vsel %vm477, %v1360, 0
      %v1401 = vsel %vm477, %v1361, 0
      %v1404 = vsel %vm477, %v1362, 0
      %v1407 = vsel %vm477, %v1363, 0
      %v1410 = vsel %vm477, %v1364, 0
      %v1413 = vsel %vm477, %v1365, 0
      %v1416 = vsel %vm477, %v1366, 0
      %v1419 = vsel %vm477, %v1367, 0
      %v1422 = vsel %vm477, %v1368, 0
      %v1425 = vsel %vm477, %v1369, 0
      %v1428 = vsel %vm477, %v1370, 0
      %v1431 = vsel %vm477, %v1371, 0
      %v1434 = vsel %vm477, %v1372, 0
      %v1437 = vsel %vm477, %v1373, 0
      %v1440 = vsel %vm477, %v1374, 0
      %v1443 = vsel %vm477, %v1375, 0
      %v1446 = vsel %vm477, %v1376, 0
      %v1449 = vsel %vm477, %v1377, 0
      %v1452 = vsel %vm477, %v1378, 0
      %v1455 = vsel %vm477, %v1379, 0
      %v1458 = vsel %vm550, %v1384, 0
      %1460 = vmatprep.subr.bf16.mxu0 0
      %1461 = vmatpush1.bf16.msra.mxu0 %v1458
      %1462 = vmatprep.subr.bf16.mxu0 0
      %1463 = vmatpush1.bf16.msra.mxu0 0
      %1464 = vmatprep.subr.bf16.mxu0 0
      %1465 = vmatpush1.bf16.msra.mxu0 0
      %1466 = vmatprep.subr.bf16.mxu0 0
      %1467 = vmatpush1.bf16.msra.mxu0 0
      %1468 = vmatprep.subr.bf16.mxu0 0
      %1469 = vmatpush1.bf16.msra.mxu0 0
      %1470 = vmatprep.subr.bf16.mxu0 0
      %1471 = vmatpush1.bf16.msra.mxu0 0
      %1472 = vmatprep.subr.bf16.mxu0 0
      %1473 = vmatpush1.bf16.msra.mxu0 0
      %1474 = vmatprep.subr.bf16.mxu0 0
      %1475 = vmatpush1.bf16.msra.mxu0 0
      %1476 = vmatprep.subr.bf16.mxu0 0
      %1477 = vmatpush1.bf16.msra.mxu0 0
      %1478 = vmatprep.subr.bf16.mxu0 0
      %1479 = vmatpush1.bf16.msra.mxu0 0
      %1480 = vmatprep.subr.bf16.mxu0 0
      %1481 = vmatpush1.bf16.msra.mxu0 0
      %1482 = vmatprep.subr.bf16.mxu0 0
      %1483 = vmatpush1.bf16.msra.mxu0 0
      %1484 = vmatprep.subr.bf16.mxu0 0
      %1485 = vmatpush1.bf16.msra.mxu0 0
      %1486 = vmatprep.subr.bf16.mxu0 0
      %1487 = vmatpush1.bf16.msra.mxu0 0
      %1488 = vmatprep.subr.bf16.mxu0 0
      %1489 = vmatpush1.bf16.msra.mxu0 0
      %1490 = vmatprep.subr.bf16.mxu0 0
      %1491 = vmatpush1.bf16.msra.mxu0 0
      %1492 = vmatprep.mubr.bf16.mxu0 0
      %1493 = vmatmul.mubr.bf16.gmra.mrb[0].mxu0 %v1386
      %v1494 = vpop.f32.mrb[0].mxu0
      %v1495 = vadd.f32 0.0, %v1494
      %v1496 = vpop.f32.mrb[0].mxu0
      %v1497 = vpop.f32.mrb[0].mxu0
      %v1498 = vadd.f32 0.0, %v1497
      %v1499 = vpop.f32.mrb[0].mxu0
      %1500 = vmatprep.mubr.bf16.mxu0 0
      %1501 = vmatmul.mubr.bf16.gmra.mrb[0].mxu0 %v1389
      %v1502 = vpop.f32.mrb[0].mxu0
      %v1503 = vadd.f32 0.0, %v1502
      %v1504 = vpop.f32.mrb[0].mxu0
      %v1505 = vpop.f32.mrb[0].mxu0
      %v1506 = vadd.f32 0.0, %v1505
      %v1507 = vpop.f32.mrb[0].mxu0
      %1508 = vmatprep.mubr.bf16.mxu0 0
      %1509 = vmatmul.mubr.bf16.gmra.mrb[0].mxu0 %v1392
      %v1510 = vpop.f32.mrb[0].mxu0
      %v1511 = vadd.f32 0.0, %v1510
      %v1512 = vpop.f32.mrb[0].mxu0
      %v1513 = vpop.f32.mrb[0].mxu0
      %v1514 = vadd.f32 0.0, %v1513
      %v1515 = vpop.f32.mrb[0].mxu0
      %1516 = vmatprep.mubr.bf16.mxu0 0
      %1517 = vmatmul.mubr.bf16.gmra.mrb[0].mxu0 %v1395
      %v1518 = vpop.f32.mrb[0].mxu0
      %v1519 = vadd.f32 0.0, %v1518
      %v1520 = vpop.f32.mrb[0].mxu0
      %v1521 = vpop.f32.mrb[0].mxu0
      %v1522 = vadd.f32 0.0, %v1521
      %v1523 = vpop.f32.mrb[0].mxu0
      %1524 = vmatprep.mubr.bf16.mxu0 0
      %1525 = vmatmul.mubr.bf16.gmra.mrb[0].mxu0 %v1398
      %v1526 = vpop.f32.mrb[0].mxu0
      %v1527 = vadd.f32 0.0, %v1526
      %v1528 = vpop.f32.mrb[0].mxu0
      %v1529 = vpop.f32.mrb[0].mxu0
      %v1530 = vadd.f32 0.0, %v1529
      %v1531 = vpop.f32.mrb[0].mxu0
      %1532 = vmatprep.mubr.bf16.mxu0 0
      %1533 = vmatmul.mubr.bf16.gmra.mrb[0].mxu0 %v1401
      %v1534 = vpop.f32.mrb[0].mxu0
      %v1535 = vadd.f32 0.0, %v1534
      %v1536 = vpop.f32.mrb[0].mxu0
      %v1537 = vpop.f32.mrb[0].mxu0
      %v1538 = vadd.f32 0.0, %v1537
      %v1539 = vpop.f32.mrb[0].mxu0
      %1540 = vmatprep.mubr.bf16.mxu0 0
      %1541 = vmatmul.mubr.bf16.gmra.mrb[0].mxu0 %v1404
      %v1542 = vpop.f32.mrb[0].mxu0
      %v1543 = vadd.f32 0.0, %v1542
      %v1544 = vpop.f32.mrb[0].mxu0
      %v1545 = vpop.f32.mrb[0].mxu0
      %v1546 = vadd.f32 0.0, %v1545
      %v1547 = vpop.f32.mrb[0].mxu0
      %1548 = vmatprep.mubr.bf16.mxu0 0
      %1549 = vmatmul.mubr.bf16.gmra.mrb[0].mxu0 %v1407
      %v1550 = vpop.f32.mrb[0].mxu0
      %v1551 = vadd.f32 0.0, %v1550
      %v1552 = vpop.f32.mrb[0].mxu0
      %v1553 = vpop.f32.mrb[0].mxu0
      %v1554 = vadd.f32 0.0, %v1553
      %v1555 = vpop.f32.mrb[0].mxu0
      %1556 = vmatprep.mubr.bf16.mxu0 0
      %1557 = vmatmul.mubr.bf16.gmra.mrb[0].mxu0 %v1410
      %v1558 = vpop.f32.mrb[0].mxu0
      %v1559 = vadd.f32 0.0, %v1558
      %v1560 = vpop.f32.mrb[0].mxu0
      %v1561 = vpop.f32.mrb[0].mxu0
      %v1562 = vadd.f32 0.0, %v1561
      %v1563 = vpop.f32.mrb[0].mxu0
      %1564 = vmatprep.mubr.bf16.mxu0 0
      %1565 = vmatmul.mubr.bf16.gmra.mrb[0].mxu0 %v1413
      %v1566 = vpop.f32.mrb[0].mxu0
      %v1567 = vadd.f32 0.0, %v1566
      %v1568 = vpop.f32.mrb[0].mxu0
      %v1569 = vpop.f32.mrb[0].mxu0
      %v1570 = vadd.f32 0.0, %v1569
      %v1571 = vpop.f32.mrb[0].mxu0
      %1572 = vmatprep.mubr.bf16.mxu0 0
      %1573 = vmatmul.mubr.bf16.gmra.mrb[0].mxu0 %v1416
      %v1574 = vpop.f32.mrb[0].mxu0
      %v1575 = vadd.f32 0.0, %v1574
      %v1576 = vpop.f32.mrb[0].mxu0
      %v1577 = vpop.f32.mrb[0].mxu0
      %v1578 = vadd.f32 0.0, %v1577
      %v1579 = vpop.f32.mrb[0].mxu0
      %1580 = vmatprep.mubr.bf16.mxu0 0
      %1581 = vmatmul.mubr.bf16.gmra.mrb[0].mxu0 %v1419
      %v1582 = vpop.f32.mrb[0].mxu0
      %v1583 = vadd.f32 0.0, %v1582
      %v1584 = vpop.f32.mrb[0].mxu0
      %v1585 = vpop.f32.mrb[0].mxu0
      %v1586 = vadd.f32 0.0, %v1585
      %v1587 = vpop.f32.mrb[0].mxu0
      %1588 = vmatprep.mubr.bf16.mxu0 0
      %1589 = vmatmul.mubr.bf16.gmra.mrb[0].mxu0 %v1422
      %v1590 = vpop.f32.mrb[0].mxu0
      %v1591 = vadd.f32 0.0, %v1590
      %v1592 = vpop.f32.mrb[0].mxu0
      %v1593 = vpop.f32.mrb[0].mxu0
      %v1594 = vadd.f32 0.0, %v1593
      %v1595 = vpop.f32.mrb[0].mxu0
      %1596 = vmatprep.mubr.bf16.mxu0 0
      %1597 = vmatmul.mubr.bf16.gmra.mrb[0].mxu0 %v1425
      %v1598 = vpop.f32.mrb[0].mxu0
      %v1599 = vadd.f32 0.0, %v1598
      %v1600 = vpop.f32.mrb[0].mxu0
      %v1601 = vpop.f32.mrb[0].mxu0
      %v1602 = vadd.f32 0.0, %v1601
      %v1603 = vpop.f32.mrb[0].mxu0
      %1604 = vmatprep.mubr.bf16.mxu0 0
      %1605 = vmatmul.mubr.bf16.gmra.mrb[0].mxu0 %v1428
      %v1606 = vpop.f32.mrb[0].mxu0
      %v1607 = vadd.f32 0.0, %v1606
      %v1608 = vpop.f32.mrb[0].mxu0
      %v1609 = vpop.f32.mrb[0].mxu0
      %v1610 = vadd.f32 0.0, %v1609
      %v1611 = vpop.f32.mrb[0].mxu0
      %1612 = vmatprep.mubr.bf16.mxu0 0
      %1613 = vmatmul.mubr.bf16.gmra.mrb[0].mxu0 %v1431
      %v1614 = vpop.f32.mrb[0].mxu0
      %v1615 = vadd.f32 0.0, %v1614
      %v1616 = vpop.f32.mrb[0].mxu0
      %v1617 = vpop.f32.mrb[0].mxu0
      %v1618 = vadd.f32 0.0, %v1617
      %v1619 = vpop.f32.mrb[0].mxu0
      %1620 = vmatprep.mubr.bf16.mxu0 0
      %1621 = vmatmul.mubr.bf16.gmra.mrb[0].mxu0 %v1434
      %v1622 = vpop.f32.mrb[0].mxu0
      %v1623 = vadd.f32 0.0, %v1622
      %v1624 = vpop.f32.mrb[0].mxu0
      %v1625 = vpop.f32.mrb[0].mxu0
      %v1626 = vadd.f32 0.0, %v1625
      %v1627 = vpop.f32.mrb[0].mxu0
      %1628 = vmatprep.mubr.bf16.mxu0 0
      %1629 = vmatmul.mubr.bf16.gmra.mrb[0].mxu0 %v1437
      %v1630 = vpop.f32.mrb[0].mxu0
      %v1631 = vadd.f32 0.0, %v1630
      %v1632 = vpop.f32.mrb[0].mxu0
      %v1633 = vpop.f32.mrb[0].mxu0
      %v1634 = vadd.f32 0.0, %v1633
      %v1635 = vpop.f32.mrb[0].mxu0
      %1636 = vmatprep.mubr.bf16.mxu0 0
      %1637 = vmatmul.mubr.bf16.gmra.mrb[0].mxu0 %v1440
      %v1638 = vpop.f32.mrb[0].mxu0
      %v1639 = vadd.f32 0.0, %v1638
      %v1640 = vpop.f32.mrb[0].mxu0
      %v1641 = vpop.f32.mrb[0].mxu0
      %v1642 = vadd.f32 0.0, %v1641
      %v1643 = vpop.f32.mrb[0].mxu0
      %1644 = vmatprep.mubr.bf16.mxu0 0
      %1645 = vmatmul.mubr.bf16.gmra.mrb[0].mxu0 %v1443
      %v1646 = vpop.f32.mrb[0].mxu0
      %v1647 = vadd.f32 0.0, %v1646
      %v1648 = vpop.f32.mrb[0].mxu0
      %v1649 = vpop.f32.mrb[0].mxu0
      %v1650 = vadd.f32 0.0, %v1649
      %v1651 = vpop.f32.mrb[0].mxu0
      %1652 = vmatprep.mubr.bf16.mxu0 0
      %1653 = vmatmul.mubr.bf16.gmra.mrb[0].mxu0 %v1446
      %v1654 = vpop.f32.mrb[0].mxu0
      %v1655 = vadd.f32 0.0, %v1654
      %v1656 = vpop.f32.mrb[0].mxu0
      %v1657 = vpop.f32.mrb[0].mxu0
      %v1658 = vadd.f32 0.0, %v1657
      %v1659 = vpop.f32.mrb[0].mxu0
      %1660 = vmatprep.mubr.bf16.mxu0 0
      %1661 = vmatmul.mubr.bf16.gmra.mrb[0].mxu0 %v1449
      %v1662 = vpop.f32.mrb[0].mxu0
      %v1663 = vadd.f32 0.0, %v1662
      %v1664 = vpop.f32.mrb[0].mxu0
      %v1665 = vpop.f32.mrb[0].mxu0
      %v1666 = vadd.f32 0.0, %v1665
      %v1667 = vpop.f32.mrb[0].mxu0
      %1668 = vmatprep.mubr.bf16.mxu0 0
      %1669 = vmatmul.mubr.bf16.gmra.mrb[0].mxu0 %v1452
      %v1670 = vpop.f32.mrb[0].mxu0
      %v1671 = vadd.f32 0.0, %v1670
      %v1672 = vpop.f32.mrb[0].mxu0
      %v1673 = vpop.f32.mrb[0].mxu0
      %v1674 = vadd.f32 0.0, %v1673
      %v1675 = vpop.f32.mrb[0].mxu0
      %1676 = vmatprep.mubr.bf16.mxu0 0
      %1677 = vmatmul.mubr.bf16.gmra.mrb[0].mxu0 %v1455
      %v1678 = vpop.f32.mrb[0].mxu0
      %v1679 = vadd.f32 0.0, %v1678
      %v1680 = vpop.f32.mrb[0].mxu0
      %v1681 = vpop.f32.mrb[0].mxu0
      %v1682 = vadd.f32 0.0, %v1681
      %v1683 = vpop.f32.mrb[0].mxu0
      %1684 = vdwg.mxu0
      %v1685 = vadd.f32 %v1014, %v1495
      %v1686 = vadd.f32 %v1017, %v1498
      %v1687 = vadd.f32 %v1022, %v1503
      %v1688 = vadd.f32 %v1025, %v1506
      %v1689 = vadd.f32 %v1030, %v1511
      %v1690 = vadd.f32 %v1033, %v1514
      %v1691 = vadd.f32 %v1038, %v1519
      %v1692 = vadd.f32 %v1041, %v1522
      %v1693 = vadd.f32 %v1046, %v1527
      %v1694 = vadd.f32 %v1049, %v1530
      %v1695 = vadd.f32 %v1054, %v1535
      %v1696 = vadd.f32 %v1057, %v1538
      %v1697 = vadd.f32 %v1062, %v1543
      %v1698 = vadd.f32 %v1065, %v1546
      %v1699 = vadd.f32 %v1070, %v1551
      %v1700 = vadd.f32 %v1073, %v1554
      %v1701 = vadd.f32 %v1078, %v1559
      %v1702 = vadd.f32 %v1081, %v1562
      %v1703 = vadd.f32 %v1086, %v1567
      %v1704 = vadd.f32 %v1089, %v1570
      %v1705 = vadd.f32 %v1094, %v1575
      %v1706 = vadd.f32 %v1097, %v1578
      %v1707 = vadd.f32 %v1102, %v1583
      %v1708 = vadd.f32 %v1105, %v1586
      %v1709 = vadd.f32 %v1110, %v1591
      %v1710 = vadd.f32 %v1113, %v1594
      %v1711 = vadd.f32 %v1118, %v1599
      %v1712 = vadd.f32 %v1121, %v1602
      %v1713 = vadd.f32 %v1126, %v1607
      %v1714 = vadd.f32 %v1129, %v1610
      %v1715 = vadd.f32 %v1134, %v1615
      %v1716 = vadd.f32 %v1137, %v1618
      %v1717 = vadd.f32 %v1142, %v1623
      %v1718 = vadd.f32 %v1145, %v1626
      %v1719 = vadd.f32 %v1150, %v1631
      %v1720 = vadd.f32 %v1153, %v1634
      %v1721 = vadd.f32 %v1158, %v1639
      %v1722 = vadd.f32 %v1161, %v1642
      %v1723 = vadd.f32 %v1166, %v1647
      %v1724 = vadd.f32 %v1169, %v1650
      %v1725 = vadd.f32 %v1174, %v1655
      %v1726 = vadd.f32 %v1177, %v1658
      %v1727 = vadd.f32 %v1182, %v1663
      %v1728 = vadd.f32 %v1185, %v1666
      %v1729 = vadd.f32 %v1190, %v1671
      %v1730 = vadd.f32 %v1193, %v1674
      %v1731 = vadd.f32 %v1198, %v1679
      %v1732 = vadd.f32 %v1201, %v1682
      %v1733 = vld [vmem:[%s226] sm:$0x1]
      %v1735 = vlaneseq
      %v1736 = vshrl.u32 %v1735, 7
      %v1737 = vsub.s32 0, %v1736
      %v1738 = vrot.slane %v1733, %v1737
      %v1740 = vadd.f32 %v1685, %v1738
      %v1741 = vadd.f32 %v1686, %v1738
      %v1742 = vadd.f32 %v1687, %v1738
      %v1743 = vadd.f32 %v1688, %v1738
      %v1744 = vadd.f32 %v1689, %v1738
      %v1745 = vadd.f32 %v1690, %v1738
      %v1746 = vadd.f32 %v1691, %v1738
      %v1747 = vadd.f32 %v1692, %v1738
      %v1748 = vadd.f32 %v1693, %v1738
      %v1749 = vadd.f32 %v1694, %v1738
      %v1750 = vadd.f32 %v1695, %v1738
      %v1751 = vadd.f32 %v1696, %v1738
      %v1752 = vadd.f32 %v1697, %v1738
      %v1753 = vadd.f32 %v1698, %v1738
      %v1754 = vadd.f32 %v1699, %v1738
      %v1755 = vadd.f32 %v1700, %v1738
      %v1756 = vadd.f32 %v1701, %v1738
      %v1757 = vadd.f32 %v1702, %v1738
      %v1758 = vadd.f32 %v1703, %v1738
      %v1759 = vadd.f32 %v1704, %v1738
      %v1760 = vadd.f32 %v1705, %v1738
      %v1761 = vadd.f32 %v1706, %v1738
      %v1762 = vadd.f32 %v1707, %v1738
      %v1763 = vadd.f32 %v1708, %v1738
      %v1764 = vadd.f32 %v1709, %v1738
      %v1765 = vadd.f32 %v1710, %v1738
      %v1766 = vadd.f32 %v1711, %v1738
      %v1767 = vadd.f32 %v1712, %v1738
      %v1768 = vadd.f32 %v1713, %v1738
      %v1769 = vadd.f32 %v1714, %v1738
      %v1770 = vadd.f32 %v1715, %v1738
      %v1771 = vadd.f32 %v1716, %v1738
      %v1772 = vadd.f32 %v1717, %v1738
      %v1773 = vadd.f32 %v1718, %v1738
      %v1774 = vadd.f32 %v1719, %v1738
      %v1775 = vadd.f32 %v1720, %v1738
      %v1776 = vadd.f32 %v1721, %v1738
      %v1777 = vadd.f32 %v1722, %v1738
      %v1778 = vadd.f32 %v1723, %v1738
      %v1779 = vadd.f32 %v1724, %v1738
      %v1780 = vadd.f32 %v1725, %v1738
      %v1781 = vadd.f32 %v1726, %v1738
      %v1782 = vadd.f32 %v1727, %v1738
      %v1783 = vadd.f32 %v1728, %v1738
      %v1784 = vadd.f32 %v1729, %v1738
      %v1785 = vadd.f32 %v1730, %v1738
      %v1786 = vadd.f32 %v1731, %v1738
      %v1787 = vadd.f32 %v1732, %v1738
      %v1788 = vxor.u32 %v1740, 2147483648
      %v1789 = vxor.u32 %v1741, 2147483648
      %v1790 = vxor.u32 %v1742, 2147483648
      %v1791 = vxor.u32 %v1743, 2147483648
      %v1792 = vxor.u32 %v1744, 2147483648
      %v1793 = vxor.u32 %v1745, 2147483648
      %v1794 = vxor.u32 %v1746, 2147483648
      %v1795 = vxor.u32 %v1747, 2147483648
      %v1796 = vxor.u32 %v1748, 2147483648
      %v1797 = vxor.u32 %v1749, 2147483648
      %v1798 = vxor.u32 %v1750, 2147483648
      %v1799 = vxor.u32 %v1751, 2147483648
      %v1800 = vxor.u32 %v1752, 2147483648
      %v1801 = vxor.u32 %v1753, 2147483648
      %v1802 = vxor.u32 %v1754, 2147483648
      %v1803 = vxor.u32 %v1755, 2147483648
      %v1804 = vxor.u32 %v1756, 2147483648
      %v1805 = vxor.u32 %v1757, 2147483648
      %v1806 = vxor.u32 %v1758, 2147483648
      %v1807 = vxor.u32 %v1759, 2147483648
      %v1808 = vxor.u32 %v1760, 2147483648
      %v1809 = vxor.u32 %v1761, 2147483648
      %v1810 = vxor.u32 %v1762, 2147483648
      %v1811 = vxor.u32 %v1763, 2147483648
      %v1812 = vxor.u32 %v1764, 2147483648
      %v1813 = vxor.u32 %v1765, 2147483648
      %v1814 = vxor.u32 %v1766, 2147483648
      %v1815 = vxor.u32 %v1767, 2147483648
      %v1816 = vxor.u32 %v1768, 2147483648
      %v1817 = vxor.u32 %v1769, 2147483648
      %v1818 = vxor.u32 %v1770, 2147483648
      %v1819 = vxor.u32 %v1771, 2147483648
      %v1820 = vxor.u32 %v1772, 2147483648
      %v1821 = vxor.u32 %v1773, 2147483648
      %v1822 = vxor.u32 %v1774, 2147483648
      %v1823 = vxor.u32 %v1775, 2147483648
      %v1824 = vxor.u32 %v1776, 2147483648
      %v1825 = vxor.u32 %v1777, 2147483648
      %v1826 = vxor.u32 %v1778, 2147483648
      %v1827 = vxor.u32 %v1779, 2147483648
      %v1828 = vxor.u32 %v1780, 2147483648
      %v1829 = vxor.u32 %v1781, 2147483648
      %v1830 = vxor.u32 %v1782, 2147483648
      %v1831 = vxor.u32 %v1783, 2147483648
      %v1832 = vxor.u32 %v1784, 2147483648
      %v1833 = vxor.u32 %v1785, 2147483648
      %v1834 = vxor.u32 %v1786, 2147483648
      %v1835 = vxor.u32 %v1787, 2147483648
      %v1836 = vmul.f32 %v1788, 1.442695
      %v1837 = vpow.pop %v1836
      %v1838 = vmul.f32 %v1789, 1.442695
      %v1839 = vpow.pop %v1838
      %v1840 = vmul.f32 %v1790, 1.442695
      %v1841 = vpow.pop %v1840
      %v1842 = vmul.f32 %v1791, 1.442695
      %v1843 = vpow.pop %v1842
      %v1844 = vmul.f32 %v1792, 1.442695
      %v1845 = vpow.pop %v1844
      %v1846 = vmul.f32 %v1793, 1.442695
      %v1847 = vpow.pop %v1846
      %v1848 = vmul.f32 %v1794, 1.442695
      %v1849 = vpow.pop %v1848
      %v1850 = vmul.f32 %v1795, 1.442695
      %v1851 = vpow.pop %v1850
      %v1852 = vmul.f32 %v1796, 1.442695
      %v1853 = vpow.pop %v1852
      %v1854 = vmul.f32 %v1797, 1.442695
      %v1855 = vpow.pop %v1854
      %v1856 = vmul.f32 %v1798, 1.442695
      %v1857 = vpow.pop %v1856
      %v1858 = vmul.f32 %v1799, 1.442695
      %v1859 = vpow.pop %v1858
      %v1860 = vmul.f32 %v1800, 1.442695
      %v1861 = vpow.pop %v1860
      %v1862 = vmul.f32 %v1801, 1.442695
      %v1863 = vpow.pop %v1862
      %v1864 = vmul.f32 %v1802, 1.442695
      %v1865 = vpow.pop %v1864
      %v1866 = vmul.f32 %v1803, 1.442695
      %v1867 = vpow.pop %v1866
      %v1868 = vmul.f32 %v1804, 1.442695
      %v1869 = vpow.pop %v1868
      %v1870 = vmul.f32 %v1805, 1.442695
      %v1871 = vpow.pop %v1870
      %v1872 = vmul.f32 %v1806, 1.442695
      %v1873 = vpow.pop %v1872
      %v1874 = vmul.f32 %v1807, 1.442695
      %v1875 = vpow.pop %v1874
      %v1876 = vmul.f32 %v1808, 1.442695
      %v1877 = vpow.pop %v1876
      %v1878 = vmul.f32 %v1809, 1.442695
      %v1879 = vpow.pop %v1878
      %v1880 = vmul.f32 %v1810, 1.442695
      %v1881 = vpow.pop %v1880
      %v1882 = vmul.f32 %v1811, 1.442695
      %v1883 = vpow.pop %v1882
      %v1884 = vmul.f32 %v1812, 1.442695
      %v1885 = vpow.pop %v1884
      %v1886 = vmul.f32 %v1813, 1.442695
      %v1887 = vpow.pop %v1886
      %v1888 = vmul.f32 %v1814, 1.442695
      %v1889 = vpow.pop %v1888
      %v1890 = vmul.f32 %v1815, 1.442695
      %v1891 = vpow.pop %v1890
      %v1892 = vmul.f32 %v1816, 1.442695
      %v1893 = vpow.pop %v1892
      %v1894 = vmul.f32 %v1817, 1.442695
      %v1895 = vpow.pop %v1894
      %v1896 = vmul.f32 %v1818, 1.442695
      %v1897 = vpow.pop %v1896
      %v1898 = vmul.f32 %v1819, 1.442695
      %v1899 = vpow.pop %v1898
      %v1900 = vmul.f32 %v1820, 1.442695
      %v1901 = vpow.pop %v1900
      %v1902 = vmul.f32 %v1821, 1.442695
      %v1903 = vpow.pop %v1902
      %v1904 = vmul.f32 %v1822, 1.442695
      %v1905 = vpow.pop %v1904
      %v1906 = vmul.f32 %v1823, 1.442695
      %v1907 = vpow.pop %v1906
      %v1908 = vmul.f32 %v1824, 1.442695
      %v1909 = vpow.pop %v1908
      %v1910 = vmul.f32 %v1825, 1.442695
      %v1911 = vpow.pop %v1910
      %v1912 = vmul.f32 %v1826, 1.442695
      %v1913 = vpow.pop %v1912
      %v1914 = vmul.f32 %v1827, 1.442695
      %v1915 = vpow.pop %v1914
      %v1916 = vmul.f32 %v1828, 1.442695
      %v1917 = vpow.pop %v1916
      %v1918 = vmul.f32 %v1829, 1.442695
      %v1919 = vpow.pop %v1918
      %v1920 = vmul.f32 %v1830, 1.442695
      %v1921 = vpow.pop %v1920
      %v1922 = vmul.f32 %v1831, 1.442695
      %v1923 = vpow.pop %v1922
      %v1924 = vmul.f32 %v1832, 1.442695
      %v1925 = vpow.pop %v1924
      %v1926 = vmul.f32 %v1833, 1.442695
      %v1927 = vpow.pop %v1926
      %v1928 = vmul.f32 %v1834, 1.442695
      %v1929 = vpow.pop %v1928
      %v1930 = vmul.f32 %v1835, 1.442695
      %v1931 = vpow.pop %v1930
      %v1932 = vadd.f32 %v1837, 1.0
      %v1933 = vadd.f32 %v1839, 1.0
      %v1934 = vadd.f32 %v1841, 1.0
      %v1935 = vadd.f32 %v1843, 1.0
      %v1936 = vadd.f32 %v1845, 1.0
      %v1937 = vadd.f32 %v1847, 1.0
      %v1938 = vadd.f32 %v1849, 1.0
      %v1939 = vadd.f32 %v1851, 1.0
      %v1940 = vadd.f32 %v1853, 1.0
      %v1941 = vadd.f32 %v1855, 1.0
      %v1942 = vadd.f32 %v1857, 1.0
      %v1943 = vadd.f32 %v1859, 1.0
      %v1944 = vadd.f32 %v1861, 1.0
      %v1945 = vadd.f32 %v1863, 1.0
      %v1946 = vadd.f32 %v1865, 1.0
      %v1947 = vadd.f32 %v1867, 1.0
      %v1948 = vadd.f32 %v1869, 1.0
      %v1949 = vadd.f32 %v1871, 1.0
      %v1950 = vadd.f32 %v1873, 1.0
      %v1951 = vadd.f32 %v1875, 1.0
      %v1952 = vadd.f32 %v1877, 1.0
      %v1953 = vadd.f32 %v1879, 1.0
      %v1954 = vadd.f32 %v1881, 1.0
      %v1955 = vadd.f32 %v1883, 1.0
      %v1956 = vadd.f32 %v1885, 1.0
      %v1957 = vadd.f32 %v1887, 1.0
      %v1958 = vadd.f32 %v1889, 1.0
      %v1959 = vadd.f32 %v1891, 1.0
      %v1960 = vadd.f32 %v1893, 1.0
      %v1961 = vadd.f32 %v1895, 1.0
      %v1962 = vadd.f32 %v1897, 1.0
      %v1963 = vadd.f32 %v1899, 1.0
      %v1964 = vadd.f32 %v1901, 1.0
      %v1965 = vadd.f32 %v1903, 1.0
      %v1966 = vadd.f32 %v1905, 1.0
      %v1967 = vadd.f32 %v1907, 1.0
      %v1968 = vadd.f32 %v1909, 1.0
      %v1969 = vadd.f32 %v1911, 1.0
      %v1970 = vadd.f32 %v1913, 1.0
      %v1971 = vadd.f32 %v1915, 1.0
      %v1972 = vadd.f32 %v1917, 1.0
      %v1973 = vadd.f32 %v1919, 1.0
      %v1974 = vadd.f32 %v1921, 1.0
      %v1975 = vadd.f32 %v1923, 1.0
      %v1976 = vadd.f32 %v1925, 1.0
      %v1977 = vadd.f32 %v1927, 1.0
      %v1978 = vadd.f32 %v1929, 1.0
      %v1979 = vadd.f32 %v1931, 1.0
      %v1980 = vrcp.pop %v1932
      %v1981 = vmul.f32 1.0, %v1980
      %v1982 = vrcp.pop %v1933
      %v1983 = vmul.f32 1.0, %v1982
      %v1984 = vrcp.pop %v1934
      %v1985 = vmul.f32 1.0, %v1984
      %v1986 = vrcp.pop %v1935
      %v1987 = vmul.f32 1.0, %v1986
      %v1988 = vrcp.pop %v1936
      %v1989 = vmul.f32 1.0, %v1988
      %v1990 = vrcp.pop %v1937
      %v1991 = vmul.f32 1.0, %v1990
      %v1992 = vrcp.pop %v1938
      %v1993 = vmul.f32 1.0, %v1992
      %v1994 = vrcp.pop %v1939
      %v1995 = vmul.f32 1.0, %v1994
      %v1996 = vrcp.pop %v1940
      %v1997 = vmul.f32 1.0, %v1996
      %v1998 = vrcp.pop %v1941
      %v1999 = vmul.f32 1.0, %v1998
      %v2000 = vrcp.pop %v1942
      %v2001 = vmul.f32 1.0, %v2000
      %v2002 = vrcp.pop %v1943
      %v2003 = vmul.f32 1.0, %v2002
      %v2004 = vrcp.pop %v1944
      %v2005 = vmul.f32 1.0, %v2004
      %v2006 = vrcp.pop %v1945
      %v2007 = vmul.f32 1.0, %v2006
      %v2008 = vrcp.pop %v1946
      %v2009 = vmul.f32 1.0, %v2008
      %v2010 = vrcp.pop %v1947
      %v2011 = vmul.f32 1.0, %v2010
      %v2012 = vrcp.pop %v1948
      %v2013 = vmul.f32 1.0, %v2012
      %v2014 = vrcp.pop %v1949
      %v2015 = vmul.f32 1.0, %v2014
      %v2016 = vrcp.pop %v1950
      %v2017 = vmul.f32 1.0, %v2016
      %v2018 = vrcp.pop %v1951
      %v2019 = vmul.f32 1.0, %v2018
      %v2020 = vrcp.pop %v1952
      %v2021 = vmul.f32 1.0, %v2020
      %v2022 = vrcp.pop %v1953
      %v2023 = vmul.f32 1.0, %v2022
      %v2024 = vrcp.pop %v1954
      %v2025 = vmul.f32 1.0, %v2024
      %v2026 = vrcp.pop %v1955
      %v2027 = vmul.f32 1.0, %v2026
      %v2028 = vrcp.pop %v1956
      %v2029 = vmul.f32 1.0, %v2028
      %v2030 = vrcp.pop %v1957
      %v2031 = vmul.f32 1.0, %v2030
      %v2032 = vrcp.pop %v1958
      %v2033 = vmul.f32 1.0, %v2032
      %v2034 = vrcp.pop %v1959
      %v2035 = vmul.f32 1.0, %v2034
      %v2036 = vrcp.pop %v1960
      %v2037 = vmul.f32 1.0, %v2036
      %v2038 = vrcp.pop %v1961
      %v2039 = vmul.f32 1.0, %v2038
      %v2040 = vrcp.pop %v1962
      %v2041 = vmul.f32 1.0, %v2040
      %v2042 = vrcp.pop %v1963
      %v2043 = vmul.f32 1.0, %v2042
      %v2044 = vrcp.pop %v1964
      %v2045 = vmul.f32 1.0, %v2044
      %v2046 = vrcp.pop %v1965
      %v2047 = vmul.f32 1.0, %v2046
      %v2048 = vrcp.pop %v1966
      %v2049 = vmul.f32 1.0, %v2048
      %v2050 = vrcp.pop %v1967
      %v2051 = vmul.f32 1.0, %v2050
      %v2052 = vrcp.pop %v1968
      %v2053 = vmul.f32 1.0, %v2052
      %v2054 = vrcp.pop %v1969
      %v2055 = vmul.f32 1.0, %v2054
      %v2056 = vrcp.pop %v1970
      %v2057 = vmul.f32 1.0, %v2056
      %v2058 = vrcp.pop %v1971
      %v2059 = vmul.f32 1.0, %v2058
      %v2060 = vrcp.pop %v1972
      %v2061 = vmul.f32 1.0, %v2060
      %v2062 = vrcp.pop %v1973
      %v2063 = vmul.f32 1.0, %v2062
      %v2064 = vrcp.pop %v1974
      %v2065 = vmul.f32 1.0, %v2064
      %v2066 = vrcp.pop %v1975
      %v2067 = vmul.f32 1.0, %v2066
      %v2068 = vrcp.pop %v1976
      %v2069 = vmul.f32 1.0, %v2068
      %v2070 = vrcp.pop %v1977
      %v2071 = vmul.f32 1.0, %v2070
      %v2072 = vrcp.pop %v1978
      %v2073 = vmul.f32 1.0, %v2072
      %v2074 = vrcp.pop %v1979
      %v2075 = vmul.f32 1.0, %v2074
      %v2076 = vmul.f32 %v1740, %v1981
      %v2077 = vmul.f32 %v1741, %v1983
      %v2078 = vmul.f32 %v1742, %v1985
      %v2079 = vmul.f32 %v1743, %v1987
      %v2080 = vmul.f32 %v1744, %v1989
      %v2081 = vmul.f32 %v1745, %v1991
      %v2082 = vmul.f32 %v1746, %v1993
      %v2083 = vmul.f32 %v1747, %v1995
      %v2084 = vmul.f32 %v1748, %v1997
      %v2085 = vmul.f32 %v1749, %v1999
      %v2086 = vmul.f32 %v1750, %v2001
      %v2087 = vmul.f32 %v1751, %v2003
      %v2088 = vmul.f32 %v1752, %v2005
      %v2089 = vmul.f32 %v1753, %v2007
      %v2090 = vmul.f32 %v1754, %v2009
      %v2091 = vmul.f32 %v1755, %v2011
      %v2092 = vmul.f32 %v1756, %v2013
      %v2093 = vmul.f32 %v1757, %v2015
      %v2094 = vmul.f32 %v1758, %v2017
      %v2095 = vmul.f32 %v1759, %v2019
      %v2096 = vmul.f32 %v1760, %v2021
      %v2097 = vmul.f32 %v1761, %v2023
      %v2098 = vmul.f32 %v1762, %v2025
      %v2099 = vmul.f32 %v1763, %v2027
      %v2100 = vmul.f32 %v1764, %v2029
      %v2101 = vmul.f32 %v1765, %v2031
      %v2102 = vmul.f32 %v1766, %v2033
      %v2103 = vmul.f32 %v1767, %v2035
      %v2104 = vmul.f32 %v1768, %v2037
      %v2105 = vmul.f32 %v1769, %v2039
      %v2106 = vmul.f32 %v1770, %v2041
      %v2107 = vmul.f32 %v1771, %v2043
      %v2108 = vmul.f32 %v1772, %v2045
      %v2109 = vmul.f32 %v1773, %v2047
      %v2110 = vmul.f32 %v1774, %v2049
      %v2111 = vmul.f32 %v1775, %v2051
      %v2112 = vmul.f32 %v1776, %v2053
      %v2113 = vmul.f32 %v1777, %v2055
      %v2114 = vmul.f32 %v1778, %v2057
      %v2115 = vmul.f32 %v1779, %v2059
      %v2116 = vmul.f32 %v1780, %v2061
      %v2117 = vmul.f32 %v1781, %v2063
      %v2118 = vmul.f32 %v1782, %v2065
      %v2119 = vmul.f32 %v1783, %v2067
      %v2120 = vmul.f32 %v1784, %v2069
      %v2121 = vmul.f32 %v1785, %v2071
      %v2122 = vmul.f32 %v1786, %v2073
      %v2123 = vmul.f32 %v1787, %v2075
      %vm2124 = vcmask 64512
      %2125 = vst.msk [vmem:[%s238] sm:$0xff] %vm2124, %v2076
      %2126 = vst.msk [vmem:[%s238 + $0x8] sm:$0xff] %vm2124, %v2077
      %2127 = vst.msk [vmem:[%s238 + $0x10] sm:$0xff] %vm2124, %v2078
      %2128 = vst.msk [vmem:[%s238 + $0x18] sm:$0xff] %vm2124, %v2079
      %2129 = vst.msk [vmem:[%s238 + $0x20] sm:$0xff] %vm2124, %v2080
      %2130 = vst.msk [vmem:[%s238 + $0x28] sm:$0xff] %vm2124, %v2081
      %2131 = vst.msk [vmem:[%s238 + $0x30] sm:$0xff] %vm2124, %v2082
      %2132 = vst.msk [vmem:[%s238 + $0x38] sm:$0xff] %vm2124, %v2083
      %2133 = vst.msk [vmem:[%s238 + $0x40] sm:$0xff] %vm2124, %v2084
      %2134 = vst.msk [vmem:[%s238 + $0x48] sm:$0xff] %vm2124, %v2085
      %2135 = vst.msk [vmem:[%s238 + $0x50] sm:$0xff] %vm2124, %v2086
      %2136 = vst.msk [vmem:[%s238 + $0x58] sm:$0xff] %vm2124, %v2087
      %2137 = vst.msk [vmem:[%s238 + $0x60] sm:$0xff] %vm2124, %v2088
      %2138 = vst.msk [vmem:[%s238 + $0x68] sm:$0xff] %vm2124, %v2089
      %2139 = vst.msk [vmem:[%s238 + $0x70] sm:$0xff] %vm2124, %v2090
      %2140 = vst.msk [vmem:[%s238 + $0x78] sm:$0xff] %vm2124, %v2091
      %2141 = vst.msk [vmem:[%s238 + $0x80] sm:$0xff] %vm2124, %v2092
      %2142 = vst.msk [vmem:[%s238 + $0x88] sm:$0xff] %vm2124, %v2093
      %2143 = vst.msk [vmem:[%s238 + $0x90] sm:$0xff] %vm2124, %v2094
      %2144 = vst.msk [vmem:[%s238 + $0x98] sm:$0xff] %vm2124, %v2095
      %2145 = vst.msk [vmem:[%s238 + $0xa0] sm:$0xff] %vm2124, %v2096
      %2146 = vst.msk [vmem:[%s238 + $0xa8] sm:$0xff] %vm2124, %v2097
      %2147 = vst.msk [vmem:[%s238 + $0xb0] sm:$0xff] %vm2124, %v2098
      %2148 = vst.msk [vmem:[%s238 + $0xb8] sm:$0xff] %vm2124, %v2099
      %2149 = vst.msk [vmem:[%s238 + $0xc0] sm:$0xff] %vm2124, %v2100
      %2150 = vst.msk [vmem:[%s238 + $0xc8] sm:$0xff] %vm2124, %v2101
      %2151 = vst.msk [vmem:[%s238 + $0xd0] sm:$0xff] %vm2124, %v2102
      %2152 = vst.msk [vmem:[%s238 + $0xd8] sm:$0xff] %vm2124, %v2103
      %2153 = vst.msk [vmem:[%s238 + $0xe0] sm:$0xff] %vm2124, %v2104
      %2154 = vst.msk [vmem:[%s238 + $0xe8] sm:$0xff] %vm2124, %v2105
      %2155 = vst.msk [vmem:[%s238 + $0xf0] sm:$0xff] %vm2124, %v2106
      %2156 = vst.msk [vmem:[%s238 + $0xf8] sm:$0xff] %vm2124, %v2107
      %2157 = vst.msk [vmem:[%s238 + $0x100] sm:$0xff] %vm2124, %v2108
      %2158 = vst.msk [vmem:[%s238 + $0x108] sm:$0xff] %vm2124, %v2109
      %2159 = vst.msk [vmem:[%s238 + $0x110] sm:$0xff] %vm2124, %v2110
      %2160 = vst.msk [vmem:[%s238 + $0x118] sm:$0xff] %vm2124, %v2111
      %2161 = vst.msk [vmem:[%s238 + $0x120] sm:$0xff] %vm2124, %v2112
      %2162 = vst.msk [vmem:[%s238 + $0x128] sm:$0xff] %vm2124, %v2113
      %2163 = vst.msk [vmem:[%s238 + $0x130] sm:$0xff] %vm2124, %v2114
      %2164 = vst.msk [vmem:[%s238 + $0x138] sm:$0xff] %vm2124, %v2115
      %2165 = vst.msk [vmem:[%s238 + $0x140] sm:$0xff] %vm2124, %v2116
      %2166 = vst.msk [vmem:[%s238 + $0x148] sm:$0xff] %vm2124, %v2117
      %2167 = vst.msk [vmem:[%s238 + $0x150] sm:$0xff] %vm2124, %v2118
      %2168 = vst.msk [vmem:[%s238 + $0x158] sm:$0xff] %vm2124, %v2119
      %2169 = vst.msk [vmem:[%s238 + $0x160] sm:$0xff] %vm2124, %v2120
      %2170 = vst.msk [vmem:[%s238 + $0x168] sm:$0xff] %vm2124, %v2121
      %2171 = vst.msk [vmem:[%s238 + $0x170] sm:$0xff] %vm2124, %v2122
      %2172 = vst.msk [vmem:[%s238 + $0x178] sm:$0xff] %vm2124, %v2123
      %s2173 = smul.u32 48, %s21
      %p2174 = scmp.lt.s32.totalorder %s19, 1
      %s2175 = scalar_select %p2174, %s19, 1
      %p2176 = scmp.lt.s32.totalorder %s2173, 47
      %s2177 = scalar_select %p2176, %s2173, 47
      %p2178 = scmp.lt.s32.totalorder %s20, 0
      %s2179 = scalar_select %p2178, %s20, 0
      %s2180 = sadd.s32 %s2179, %s2177
      %s2181 = smul.addr %s2175, 48
      %s2182 = sadd.s32 %s2180, %s2181
      %s2183 = smul.addr %s2182, 8
      %s2184 = scalar_lea.vmem %s3, %s2183
      // Predicated region
      $region33: #{conv_bn_silu.1} parent=31 // pred_check
        %p2185 = pneg %p133
      $region34: #{conv_bn_silu.1} parent=31 // pred_check_branch
        %2187 = sbr.rel (%p2185) target = $region36
      $region35: #{conv_bn_silu.1} parent=31 // pred_region
        %s2188 = smul.u32 48, %s21
      $region36: #{conv_bn_silu.1} parent=31 // pred_fallthru
        _
    $region32: #{conv_bn_silu.1} parent=5 // pred_fallthru
      _
    %p2189 = scmp.le.s32.totalorder 2, %s9
    // Predicated region
    $region37: #{conv_bn_silu.1} parent=5 // pred_check
      %p2190 = pneg %p2189
    $region38: #{conv_bn_silu.1} parent=5 // pred_check_branch
      %2192 = sbr.rel (%p2190) target = $region40
    $region39: #{conv_bn_silu.1} parent=5 // pred_region
      %s2193 = ssub.s32 %s9, 2
      // Predicated region
      $region41: #{conv_bn_silu.1} parent=39 // pred_check
        %p2194 = pneg %p139
      $region42: #{conv_bn_silu.1} parent=39 // pred_check_branch
        %2196 = sbr.rel (%p2194) target = $region44
      $region43: #{conv_bn_silu.1} parent=39 // pred_region
        %s2197 = smul.u32 48, %s24
        %p2198 = scmp.lt.s32.totalorder %s22, 1
        %s2199 = scalar_select %p2198, %s22, 1
        %p2200 = scmp.lt.s32.totalorder %s2197, 47
        %s2201 = scalar_select %p2200, %s2197, 47
        %p2202 = scmp.lt.s32.totalorder %s23, 0
        %s2203 = scalar_select %p2202, %s23, 0
        %s2204 = sadd.s32 %s2203, %s2201
        %s2205 = smul.addr %s2199, 48
        %s2206 = sadd.s32 %s2204, %s2205
        %s2207 = smul.addr %s2206, 8
        %s2208 = scalar_lea.vmem %s3, %s2207
      $region44: #{conv_bn_silu.1} parent=39 // pred_fallthru
        _
    $region40: #{conv_bn_silu.1} parent=5 // pred_fallthru
      _
  $region6: #{conv_bn_silu.1} parent=0 // loop_footer
    %s13 = sadd.s32 1, %s9
  $region7: #{conv_bn_silu.1} parent=0 // loop_footer_branch
    %8 = sbr.rel target = $region3
  $region8: #{conv_bn_silu.1} parent=0 // loop_exit
    _

</llo_original>
